<compile_context>
chip_gen: v7x
topology: tpu7x:2x2x1
jax: 0.10.0
libtpu: 0.0.40
codegen_flags: <defaults>
</compile_context>

<pallas_src>
import functools

import jax
import jax.numpy as jnp
import numpy as np
from jax.experimental import pallas as pl
from jax.experimental.pallas import tpu as pltpu


def decoder_kernel(x_ref, h0_ref, wih_ref, whh_ref, bgi_ref, bhhn_ref,
                   wfc_ref, bfc_ref, pred_ref, hout_ref, gi_ref, hist_ref):
    TB = x_ref.shape[0]           # T * Bp
    Bp, Hp = h0_ref.shape         # padded batch / hidden
    T = TB // Bp

    # ---- Phase 1: input projection for ALL timesteps in one MXU matmul. ----
    # bgi already contains b_ih (all gates) plus b_hh for the r/z gates.
    gi_ref[...] = (
        jnp.dot(x_ref[...], wih_ref[...], preferred_element_type=jnp.float32)
        + bgi_ref[...]
    )

    # Hoist weight loads / bias broadcast out of the serial loop
    # (JAX does not CSE broadcast_in_dim inside the loop body).
    whh = whh_ref[...]                                        # (Hp, 3Hp)
    bhh_n = jnp.broadcast_to(bhhn_ref[...], (Bp, Hp))         # (Bp, Hp)

    # ---- Phase 2: the truly sequential recurrence (h @ W_hh only). ----
    def step(t, h):
        off = pl.multiple_of(t * Bp, Bp)
        gi = gi_ref[pl.ds(off, Bp), :]                        # (Bp, 3Hp), aligned
        gh = jnp.dot(h, whh, preferred_element_type=jnp.float32)

        # r and z are adjacent lane-tile blocks: one merged sigmoid, free slices.
        rz = jax.nn.sigmoid(gi[:, :2 * Hp] + gh[:, :2 * Hp])
        r = rz[:, :Hp]
        z = rz[:, Hp:2 * Hp]
        # Only the n-gate b_hh block must stay inside the r multiply.
        n = jnp.tanh(gi[:, 2 * Hp:] + r * (gh[:, 2 * Hp:] + bhh_n))
        h_new = n + z * (h - n)                               # == (1-z)*n + z*h

        hist_ref[pl.ds(off, Bp), :] = h_new                   # lane-dense store
        return h_new

    # T is tiny and static here; full unroll is fine (use bounded unroll for long T).
    h_final = jax.lax.fori_loop(0, T, step, h0_ref[...], unroll=True)
    hout_ref[...] = h_final

    # ---- Phase 3: FC + exp for ALL timesteps, lane-dense (Op = 128) output. ----
    pred_ref[...] = jnp.exp(
        jnp.dot(hist_ref[...], wfc_ref[...], preferred_element_type=jnp.float32)
        + bfc_ref[...]
    )


def _pad_gate_cols(w, H, Hp):
    """(rows, 3H) -> (rows, 3Hp): each PyTorch gate block [r|z|n] placed at g*Hp."""
    rows = w.shape[0]
    out = jnp.zeros((rows, 3 * Hp), jnp.float32)
    for g in range(3):
        out = out.at[:, g * Hp:g * Hp + H].set(w[:, g * H:(g + 1) * H])
    return out


@functools.partial(jax.jit, static_argnames=())
def decoder_forward(x, h0, params):
    """x: (B, T, I) f32.  h0: (num_layers=1, B, H) f32.  Returns (pred, hidden)."""
    B, T, I = x.shape
    H = params["w_hh"].shape[1]      # w_hh: (3H, H)
    O = params["w_fc"].shape[0]      # w_fc: (O, H)

    Bp = max(8, -(-B // 8) * 8)          # pad batch to sublane multiple
    Hp = max(128, -(-H // 128) * 128)    # pad hidden to lane multiple
    Op = max(128, -(-O // 128) * 128)    # pad FC output to lane multiple (dense stores)

    # --- Weight / bias padding + pre-transposition (zero-padding is exact). ---
    wih_p = _pad_ate = _pad_gate_cols(params["w_ih"].T, H, Hp)            # (I, 3Hp)
    whh_p = jnp.zeros((Hp, 3 * Hp), jnp.float32).at[:H, :].set(
        _pad_gate_cols(params["w_hh"].T, H, Hp))                          # (Hp, 3Hp)

    bih = params["b_ih"].astype(jnp.float32)
    bhh = params["b_hh"].astype(jnp.float32)
    # Fold b_hh_r and b_hh_z into the Phase-1 bias; keep b_hh_n separate (it must
    # sit inside the r multiply for the n gate).
    bgi = jnp.concatenate(
        [bih[:H] + bhh[:H], bih[H:2 * H] + bhh[H:2 * H], bih[2 * H:]])    # (3H,)
    bgi_p = _pad_gate_cols(bgi.reshape(1, 3 * H), H, Hp)                  # (1, 3Hp)
    bhhn_p = jnp.zeros((1, Hp), jnp.float32).at[:, :H].set(
        bhh[2 * H:].reshape(1, H))                                        # (1, Hp)

    wfc_p = jnp.zeros((Hp, Op), jnp.float32).at[:H, :O].set(params["w_fc"].T)
    bfc_p = jnp.zeros((1, Op), jnp.float32).at[:, :O].set(
        params["b_fc"].reshape(1, O).astype(jnp.float32))

    # Time-major, batch-padded, flattened x: row t*Bp + b holds x[b, t].
    x_tm = jnp.swapaxes(x, 0, 1)                                          # (T, B, I)
    x_tm = jnp.pad(x_tm, ((0, 0), (0, Bp - B), (0, 0)))
    x_flat = x_tm.reshape(T * Bp, I).astype(jnp.float32)

    h0_p = jnp.pad(h0[0].astype(jnp.float32), ((0, Bp - B), (0, Hp - H)))  # (Bp, Hp)

    vmem = pl.BlockSpec(memory_space=pltpu.MemorySpace.VMEM)
    pred_flat, h_out = pl.pallas_call(
        decoder_kernel,
        out_shape=(
            jax.ShapeDtypeStruct((T * Bp, Op), jnp.float32),
            jax.ShapeDtypeStruct((Bp, Hp), jnp.float32),
        ),
        in_specs=[vmem] * 8,
        out_specs=(vmem, vmem),
        scratch_shapes=[
            pltpu.VMEM((T * Bp, 3 * Hp), jnp.float32),   # gi history
            pltpu.VMEM((T * Bp, Hp), jnp.float32),       # h history
        ],
        compiler_params=pltpu.CompilerParams(
            vmem_limit_bytes=32 * 1024 * 1024),          # safe on v5e/v6e/v7x
    )(x_flat, h0_p, wih_p, whh_p, bgi_p, bhhn_p, wfc_p, bfc_p)

    # Padded output lanes hold exp(0)=1.0 — slice them (and padded batch) off.
    pred = pred_flat.reshape(T, Bp, Op)[:, :B, :O].transpose(1, 0, 2)     # (B, T, O)
    hidden = h_out[:B, :H][None, :, :]                                    # (1, B, H)
    return pred, hidden


def decoder_reference(x, h0, params):
    """Pure-JAX reference for correctness checking."""
    H = params["w_hh"].shape[1]
    wih_t, whh_t = params["w_ih"].T, params["w_hh"].T
    bih, bhh = params["b_ih"], params["b_hh"]
    wfc_t, bfc = params["w_fc"].T, params["b_fc"]

    def step(h, x_t):
        gi = x_t @ wih_t + bih
        gh = h @ whh_t + bhh
        r = jax.nn.sigmoid(gi[:, :H] + gh[:, :H])
        z = jax.nn.sigmoid(gi[:, H:2 * H] + gh[:, H:2 * H])
        n = jnp.tanh(gi[:, 2 * H:] + r * gh[:, 2 * H:])
        h_new = (1.0 - z) * n + z * h
        return h_new, h_new

    h_final, hs = jax.lax.scan(step, h0[0], jnp.swapaxes(x, 0, 1))
    out = jnp.swapaxes(hs, 0, 1)                      # (B, T, H)
    pred = jnp.exp(out @ wfc_t + bfc)
    return pred, h_final[None]


def init_params(key, input_size, hidden_size, output_size):
    """Deterministic init matching PyTorch shapes: uniform(-1/sqrt(H), 1/sqrt(H))."""
    k = 1.0 / np.sqrt(hidden_size)
    keys = jax.random.split(key, 6)
    u = lambda kk, shape: jax.random.uniform(kk, shape, jnp.float32, -k, k)
    return {
        "w_ih": u(keys[0], (3 * hidden_size, input_size)),
        "w_hh": u(keys[1], (3 * hidden_size, hidden_size)),
        "b_ih": u(keys[2], (3 * hidden_size,)),
        "b_hh": u(keys[3], (3 * hidden_size,)),
        "w_fc": u(keys[4], (output_size, hidden_size)),
        "b_fc": u(keys[5], (output_size,)),
    }


if __name__ == "__main__":
    B, T, I, H, O = 2, 8, 3, 8, 1   # batch, seq, input_size, hidden_size, output_size

    key = jax.random.PRNGKey(0)
    kx, kh, kp = jax.random.split(key, 3)
    x = jax.random.normal(kx, (B, T, I), jnp.float32)
    h0 = jax.random.normal(kh, (1, B, H), jnp.float32)   # (num_layers, B, H)
    params = init_params(kp, I, H, O)

    pred, hidden = decoder_forward(x, h0, params)
    pred = jax.block_until_ready(pred)
    hidden = jax.block_until_ready(hidden)

    pred_ref, hidden_ref = decoder_reference(x, h0, params)
    assert pred.shape == (B, T, O) and hidden.shape == (1, B, H)
    np.testing.assert_allclose(np.asarray(pred), np.asarray(pred_ref), rtol=1e-5, atol=1e-5)
    np.testing.assert_allclose(np.asarray(hidden), np.asarray(hidden_ref), rtol=1e-5, atol=1e-5)

    print("KERNEL_OK")
</pallas_src>

<mosaic_0001>
module attributes {stable_mosaic.version = 11 : i64} {
  func.func @decoder_kernel(%arg0: memref<64x3xf32, #tpu.memory_space<vmem>>, %arg1: memref<8x128xf32, #tpu.memory_space<vmem>>, %arg2: memref<3x384xf32, #tpu.memory_space<vmem>>, %arg3: memref<128x384xf32, #tpu.memory_space<vmem>>, %arg4: memref<1x384xf32, #tpu.memory_space<vmem>>, %arg5: memref<1x128xf32, #tpu.memory_space<vmem>>, %arg6: memref<128x128xf32, #tpu.memory_space<vmem>>, %arg7: memref<1x128xf32, #tpu.memory_space<vmem>>, %arg8: memref<64x128xf32, #tpu.memory_space<vmem>>, %arg9: memref<8x128xf32, #tpu.memory_space<vmem>>, %arg10: memref<64x384xf32, #tpu.memory_space<vmem>>, %arg11: memref<64x128xf32, #tpu.memory_space<vmem>>) attributes {dimension_semantics = [], scalar_prefetch = 0 : i64, scratch_operands = 2 : i64, tpu.core_type = #tpu.core_type<tc>} {
    %c0 = arith.constant 0 : index
    %c0_0 = arith.constant 0 : index
    %0 = vector.load %arg0[%c0, %c0_0] : memref<64x3xf32, #tpu.memory_space<vmem>>, vector<64x3xf32>
    %c0_1 = arith.constant 0 : index
    %c0_2 = arith.constant 0 : index
    %1 = vector.load %arg2[%c0_1, %c0_2] : memref<3x384xf32, #tpu.memory_space<vmem>>, vector<3x384xf32>
    %cst = arith.constant dense<0.000000e+00> : vector<64x384xf32>
    %2 = tpu.matmul %0, %1, %cst {dimension_numbers = #tpu.dot_dimension_numbers<[1], [0], [0], [1], [0, 0, 1, 1], [], []>} : vector<64x3xf32>, vector<3x384xf32>, vector<64x384xf32> -> vector<64x384xf32>
    %c0_3 = arith.constant 0 : index
    %c0_4 = arith.constant 0 : index
    %3 = vector.load %arg4[%c0_3, %c0_4] : memref<1x384xf32, #tpu.memory_space<vmem>>, vector<1x384xf32>
    %4 = vector.broadcast %3 : vector<1x384xf32> to vector<64x384xf32>
    %5 = arith.addf %2, %4 : vector<64x384xf32>
    %c0_5 = arith.constant 0 : index
    %c0_6 = arith.constant 0 : index
    %6 = vector.load %arg10[%c0_5, %c0_6] : memref<64x384xf32, #tpu.memory_space<vmem>>, vector<64x384xf32>
    tpu.vector_store %arg10[%c0_5, %c0_6], %5 {strides = array<i32>} : memref<64x384xf32, #tpu.memory_space<vmem>>, vector<64x384xf32>,
    %c0_7 = arith.constant 0 : index
    %c0_8 = arith.constant 0 : index
    %7 = vector.load %arg3[%c0_7, %c0_8] : memref<128x384xf32, #tpu.memory_space<vmem>>, vector<128x384xf32>
    %c0_9 = arith.constant 0 : index
    %c0_10 = arith.constant 0 : index
    %8 = vector.load %arg5[%c0_9, %c0_10] : memref<1x128xf32, #tpu.memory_space<vmem>>, vector<1x128xf32>
    %9 = vector.shape_cast %8 : vector<1x128xf32> to vector<1x128xf32>
    %10 = vector.broadcast %9 : vector<1x128xf32> to vector<8x128xf32>
    %c0_11 = arith.constant 0 : index
    %c0_12 = arith.constant 0 : index
    %11 = vector.load %arg1[%c0_11, %c0_12] : memref<8x128xf32, #tpu.memory_space<vmem>>, vector<8x128xf32>
    %c0_i32 = arith.constant 0 : i32
    %c8_i32 = arith.constant 8 : i32
    %12 = arith.muli %c0_i32, %c8_i32 : i32
    %13 = tpu.assume_multiple %12, 8 : i32
    %14 = arith.index_cast %13 : i32 to index
    %c0_13 = arith.constant 0 : index
    %15 = vector.load %arg10[%14, %c0_13] : memref<64x384xf32, #tpu.memory_space<vmem>>, vector<8x384xf32>
    %cst_14 = arith.constant dense<0.000000e+00> : vector<8x384xf32>
    %16 = tpu.matmul %11, %7, %cst_14 {dimension_numbers = #tpu.dot_dimension_numbers<[1], [0], [0], [1], [0, 0, 1, 1], [], []>} : vector<8x128xf32>, vector<128x384xf32>, vector<8x384xf32> -> vector<8x384xf32>
    %17 = vector.extract_strided_slice %15 {offsets = [0, 0], sizes = [8, 256], strides = [1, 1]} : vector<8x384xf32> to vector<8x256xf32>
    %18 = vector.extract_strided_slice %16 {offsets = [0, 0], sizes = [8, 256], strides = [1, 1]} : vector<8x384xf32> to vector<8x256xf32>
    %19 = arith.addf %17, %18 : vector<8x256xf32>
    %20 = arith.negf %19 : vector<8x256xf32>
    %21 = math.exp %20 : vector<8x256xf32>
    %cst_15 = arith.constant 1.000000e+00 : f32
    %22 = vector.broadcast %cst_15 : f32 to vector<8x256xf32>
    %23 = arith.addf %22, %21 : vector<8x256xf32>
    %24 = arith.divf %22, %23 : vector<8x256xf32>
    %25 = vector.extract_strided_slice %24 {offsets = [0, 0], sizes = [8, 128], strides = [1, 1]} : vector<8x256xf32> to vector<8x128xf32>
    %26 = vector.extract_strided_slice %24 {offsets = [0, 128], sizes = [8, 128], strides = [1, 1]} : vector<8x256xf32> to vector<8x128xf32>
    %27 = vector.extract_strided_slice %15 {offsets = [0, 256], sizes = [8, 128], strides = [1, 1]} : vector<8x384xf32> to vector<8x128xf32>
    %28 = vector.extract_strided_slice %16 {offsets = [0, 256], sizes = [8, 128], strides = [1, 1]} : vector<8x384xf32> to vector<8x128xf32>
    %29 = arith.addf %28, %10 : vector<8x128xf32>
    %30 = arith.mulf %25, %29 : vector<8x128xf32>
    %31 = arith.addf %27, %30 : vector<8x128xf32>
    %32 = math.tanh %31 : vector<8x128xf32>
    %33 = arith.subf %11, %32 : vector<8x128xf32>
    %34 = arith.mulf %26, %33 : vector<8x128xf32>
    %35 = arith.addf %32, %34 : vector<8x128xf32>
    %36 = arith.index_cast %13 : i32 to index
    %c0_16 = arith.constant 0 : index
    %37 = vector.load %arg11[%36, %c0_16] : memref<64x128xf32, #tpu.memory_space<vmem>>, vector<8x128xf32>
    tpu.vector_store %arg11[%36, %c0_16], %35 {strides = array<i32>} : memref<64x128xf32, #tpu.memory_space<vmem>>, vector<8x128xf32>,
    %c1_i32 = arith.constant 1 : i32
    %c8_i32_17 = arith.constant 8 : i32
    %38 = arith.muli %c1_i32, %c8_i32_17 : i32
    %39 = tpu.assume_multiple %38, 8 : i32
    %40 = arith.index_cast %39 : i32 to index
    %c0_18 = arith.constant 0 : index
    %41 = vector.load %arg10[%40, %c0_18] : memref<64x384xf32, #tpu.memory_space<vmem>>, vector<8x384xf32>
    %cst_19 = arith.constant dense<0.000000e+00> : vector<8x384xf32>
    %42 = tpu.matmul %35, %7, %cst_19 {dimension_numbers = #tpu.dot_dimension_numbers<[1], [0], [0], [1], [0, 0, 1, 1], [], []>} : vector<8x128xf32>, vector<128x384xf32>, vector<8x384xf32> -> vector<8x384xf32>
    %43 = vector.extract_strided_slice %41 {offsets = [0, 0], sizes = [8, 256], strides = [1, 1]} : vector<8x384xf32> to vector<8x256xf32>
    %44 = vector.extract_strided_slice %42 {offsets = [0, 0], sizes = [8, 256], strides = [1, 1]} : vector<8x384xf32> to vector<8x256xf32>
    %45 = arith.addf %43, %44 : vector<8x256xf32>
    %46 = arith.negf %45 : vector<8x256xf32>
    %47 = math.exp %46 : vector<8x256xf32>
    %cst_20 = arith.constant 1.000000e+00 : f32
    %48 = vector.broadcast %cst_20 : f32 to vector<8x256xf32>
    %49 = arith.addf %48, %47 : vector<8x256xf32>
    %50 = arith.divf %48, %49 : vector<8x256xf32>
    %51 = vector.extract_strided_slice %50 {offsets = [0, 0], sizes = [8, 128], strides = [1, 1]} : vector<8x256xf32> to vector<8x128xf32>
    %52 = vector.extract_strided_slice %50 {offsets = [0, 128], sizes = [8, 128], strides = [1, 1]} : vector<8x256xf32> to vector<8x128xf32>
    %53 = vector.extract_strided_slice %41 {offsets = [0, 256], sizes = [8, 128], strides = [1, 1]} : vector<8x384xf32> to vector<8x128xf32>
    %54 = vector.extract_strided_slice %42 {offsets = [0, 256], sizes = [8, 128], strides = [1, 1]} : vector<8x384xf32> to vector<8x128xf32>
    %55 = arith.addf %54, %10 : vector<8x128xf32>
    %56 = arith.mulf %51, %55 : vector<8x128xf32>
    %57 = arith.addf %53, %56 : vector<8x128xf32>
    %58 = math.tanh %57 : vector<8x128xf32>
    %59 = arith.subf %35, %58 : vector<8x128xf32>
    %60 = arith.mulf %52, %59 : vector<8x128xf32>
    %61 = arith.addf %58, %60 : vector<8x128xf32>
    %62 = arith.index_cast %39 : i32 to index
    %c0_21 = arith.constant 0 : index
    %63 = vector.load %arg11[%62, %c0_21] : memref<64x128xf32, #tpu.memory_space<vmem>>, vector<8x128xf32>
    tpu.vector_store %arg11[%62, %c0_21], %61 {strides = array<i32>} : memref<64x128xf32, #tpu.memory_space<vmem>>, vector<8x128xf32>,
    %c2_i32 = arith.constant 2 : i32
    %c8_i32_22 = arith.constant 8 : i32
    %64 = arith.muli %c2_i32, %c8_i32_22 : i32
    %65 = tpu.assume_multiple %64, 8 : i32
    %66 = arith.index_cast %65 : i32 to index
    %c0_23 = arith.constant 0 : index
    %67 = vector.load %arg10[%66, %c0_23] : memref<64x384xf32, #tpu.memory_space<vmem>>, vector<8x384xf32>
    %cst_24 = arith.constant dense<0.000000e+00> : vector<8x384xf32>
    %68 = tpu.matmul %61, %7, %cst_24 {dimension_numbers = #tpu.dot_dimension_numbers<[1], [0], [0], [1], [0, 0, 1, 1], [], []>} : vector<8x128xf32>, vector<128x384xf32>, vector<8x384xf32> -> vector<8x384xf32>
    %69 = vector.extract_strided_slice %67 {offsets = [0, 0], sizes = [8, 256], strides = [1, 1]} : vector<8x384xf32> to vector<8x256xf32>
    %70 = vector.extract_strided_slice %68 {offsets = [0, 0], sizes = [8, 256], strides = [1, 1]} : vector<8x384xf32> to vector<8x256xf32>
    %71 = arith.addf %69, %70 : vector<8x256xf32>
    %72 = arith.negf %71 : vector<8x256xf32>
    %73 = math.exp %72 : vector<8x256xf32>
    %cst_25 = arith.constant 1.000000e+00 : f32
    %74 = vector.broadcast %cst_25 : f32 to vector<8x256xf32>
    %75 = arith.addf %74, %73 : vector<8x256xf32>
    %76 = arith.divf %74, %75 : vector<8x256xf32>
    %77 = vector.extract_strided_slice %76 {offsets = [0, 0], sizes = [8, 128], strides = [1, 1]} : vector<8x256xf32> to vector<8x128xf32>
    %78 = vector.extract_strided_slice %76 {offsets = [0, 128], sizes = [8, 128], strides = [1, 1]} : vector<8x256xf32> to vector<8x128xf32>
    %79 = vector.extract_strided_slice %67 {offsets = [0, 256], sizes = [8, 128], strides = [1, 1]} : vector<8x384xf32> to vector<8x128xf32>
    %80 = vector.extract_strided_slice %68 {offsets = [0, 256], sizes = [8, 128], strides = [1, 1]} : vector<8x384xf32> to vector<8x128xf32>
    %81 = arith.addf %80, %10 : vector<8x128xf32>
    %82 = arith.mulf %77, %81 : vector<8x128xf32>
    %83 = arith.addf %79, %82 : vector<8x128xf32>
    %84 = math.tanh %83 : vector<8x128xf32>
    %85 = arith.subf %61, %84 : vector<8x128xf32>
    %86 = arith.mulf %78, %85 : vector<8x128xf32>
    %87 = arith.addf %84, %86 : vector<8x128xf32>
    %88 = arith.index_cast %65 : i32 to index
    %c0_26 = arith.constant 0 : index
    %89 = vector.load %arg11[%88, %c0_26] : memref<64x128xf32, #tpu.memory_space<vmem>>, vector<8x128xf32>
    tpu.vector_store %arg11[%88, %c0_26], %87 {strides = array<i32>} : memref<64x128xf32, #tpu.memory_space<vmem>>, vector<8x128xf32>,
    %c3_i32 = arith.constant 3 : i32
    %c8_i32_27 = arith.constant 8 : i32
    %90 = arith.muli %c3_i32, %c8_i32_27 : i32
    %91 = tpu.assume_multiple %90, 8 : i32
    %92 = arith.index_cast %91 : i32 to index
    %c0_28 = arith.constant 0 : index
    %93 = vector.load %arg10[%92, %c0_28] : memref<64x384xf32, #tpu.memory_space<vmem>>, vector<8x384xf32>
    %cst_29 = arith.constant dense<0.000000e+00> : vector<8x384xf32>
    %94 = tpu.matmul %87, %7, %cst_29 {dimension_numbers = #tpu.dot_dimension_numbers<[1], [0], [0], [1], [0, 0, 1, 1], [], []>} : vector<8x128xf32>, vector<128x384xf32>, vector<8x384xf32> -> vector<8x384xf32>
    %95 = vector.extract_strided_slice %93 {offsets = [0, 0], sizes = [8, 256], strides = [1, 1]} : vector<8x384xf32> to vector<8x256xf32>
    %96 = vector.extract_strided_slice %94 {offsets = [0, 0], sizes = [8, 256], strides = [1, 1]} : vector<8x384xf32> to vector<8x256xf32>
    %97 = arith.addf %95, %96 : vector<8x256xf32>
    %98 = arith.negf %97 : vector<8x256xf32>
    %99 = math.exp %98 : vector<8x256xf32>
    %cst_30 = arith.constant 1.000000e+00 : f32
    %100 = vector.broadcast %cst_30 : f32 to vector<8x256xf32>
    %101 = arith.addf %100, %99 : vector<8x256xf32>
    %102 = arith.divf %100, %101 : vector<8x256xf32>
    %103 = vector.extract_strided_slice %102 {offsets = [0, 0], sizes = [8, 128], strides = [1, 1]} : vector<8x256xf32> to vector<8x128xf32>
    %104 = vector.extract_strided_slice %102 {offsets = [0, 128], sizes = [8, 128], strides = [1, 1]} : vector<8x256xf32> to vector<8x128xf32>
    %105 = vector.extract_strided_slice %93 {offsets = [0, 256], sizes = [8, 128], strides = [1, 1]} : vector<8x384xf32> to vector<8x128xf32>
    %106 = vector.extract_strided_slice %94 {offsets = [0, 256], sizes = [8, 128], strides = [1, 1]} : vector<8x384xf32> to vector<8x128xf32>
    %107 = arith.addf %106, %10 : vector<8x128xf32>
    %108 = arith.mulf %103, %107 : vector<8x128xf32>
    %109 = arith.addf %105, %108 : vector<8x128xf32>
    %110 = math.tanh %109 : vector<8x128xf32>
    %111 = arith.subf %87, %110 : vector<8x128xf32>
    %112 = arith.mulf %104, %111 : vector<8x128xf32>
    %113 = arith.addf %110, %112 : vector<8x128xf32>
    %114 = arith.index_cast %91 : i32 to index
    %c0_31 = arith.constant 0 : index
    %115 = vector.load %arg11[%114, %c0_31] : memref<64x128xf32, #tpu.memory_space<vmem>>, vector<8x128xf32>
    tpu.vector_store %arg11[%114, %c0_31], %113 {strides = array<i32>} : memref<64x128xf32, #tpu.memory_space<vmem>>, vector<8x128xf32>,
    %c4_i32 = arith.constant 4 : i32
    %c8_i32_32 = arith.constant 8 : i32
    %116 = arith.muli %c4_i32, %c8_i32_32 : i32
    %117 = tpu.assume_multiple %116, 8 : i32
    %118 = arith.index_cast %117 : i32 to index
    %c0_33 = arith.constant 0 : index
    %119 = vector.load %arg10[%118, %c0_33] : memref<64x384xf32, #tpu.memory_space<vmem>>, vector<8x384xf32>
    %cst_34 = arith.constant dense<0.000000e+00> : vector<8x384xf32>
    %120 = tpu.matmul %113, %7, %cst_34 {dimension_numbers = #tpu.dot_dimension_numbers<[1], [0], [0], [1], [0, 0, 1, 1], [], []>} : vector<8x128xf32>, vector<128x384xf32>, vector<8x384xf32> -> vector<8x384xf32>
    %121 = vector.extract_strided_slice %119 {offsets = [0, 0], sizes = [8, 256], strides = [1, 1]} : vector<8x384xf32> to vector<8x256xf32>
    %122 = vector.extract_strided_slice %120 {offsets = [0, 0], sizes = [8, 256], strides = [1, 1]} : vector<8x384xf32> to vector<8x256xf32>
    %123 = arith.addf %121, %122 : vector<8x256xf32>
    %124 = arith.negf %123 : vector<8x256xf32>
    %125 = math.exp %124 : vector<8x256xf32>
    %cst_35 = arith.constant 1.000000e+00 : f32
    %126 = vector.broadcast %cst_35 : f32 to vector<8x256xf32>
    %127 = arith.addf %126, %125 : vector<8x256xf32>
    %128 = arith.divf %126, %127 : vector<8x256xf32>
    %129 = vector.extract_strided_slice %128 {offsets = [0, 0], sizes = [8, 128], strides = [1, 1]} : vector<8x256xf32> to vector<8x128xf32>
    %130 = vector.extract_strided_slice %128 {offsets = [0, 128], sizes = [8, 128], strides = [1, 1]} : vector<8x256xf32> to vector<8x128xf32>
    %131 = vector.extract_strided_slice %119 {offsets = [0, 256], sizes = [8, 128], strides = [1, 1]} : vector<8x384xf32> to vector<8x128xf32>
    %132 = vector.extract_strided_slice %120 {offsets = [0, 256], sizes = [8, 128], strides = [1, 1]} : vector<8x384xf32> to vector<8x128xf32>
    %133 = arith.addf %132, %10 : vector<8x128xf32>
    %134 = arith.mulf %129, %133 : vector<8x128xf32>
    %135 = arith.addf %131, %134 : vector<8x128xf32>
    %136 = math.tanh %135 : vector<8x128xf32>
    %137 = arith.subf %113, %136 : vector<8x128xf32>
    %138 = arith.mulf %130, %137 : vector<8x128xf32>
    %139 = arith.addf %136, %138 : vector<8x128xf32>
    %140 = arith.index_cast %117 : i32 to index
    %c0_36 = arith.constant 0 : index
    %141 = vector.load %arg11[%140, %c0_36] : memref<64x128xf32, #tpu.memory_space<vmem>>, vector<8x128xf32>
    tpu.vector_store %arg11[%140, %c0_36], %139 {strides = array<i32>} : memref<64x128xf32, #tpu.memory_space<vmem>>, vector<8x128xf32>,
    %c5_i32 = arith.constant 5 : i32
    %c8_i32_37 = arith.constant 8 : i32
    %142 = arith.muli %c5_i32, %c8_i32_37 : i32
    %143 = tpu.assume_multiple %142, 8 : i32
    %144 = arith.index_cast %143 : i32 to index
    %c0_38 = arith.constant 0 : index
    %145 = vector.load %arg10[%144, %c0_38] : memref<64x384xf32, #tpu.memory_space<vmem>>, vector<8x384xf32>
    %cst_39 = arith.constant dense<0.000000e+00> : vector<8x384xf32>
    %146 = tpu.matmul %139, %7, %cst_39 {dimension_numbers = #tpu.dot_dimension_numbers<[1], [0], [0], [1], [0, 0, 1, 1], [], []>} : vector<8x128xf32>, vector<128x384xf32>, vector<8x384xf32> -> vector<8x384xf32>
    %147 = vector.extract_strided_slice %145 {offsets = [0, 0], sizes = [8, 256], strides = [1, 1]} : vector<8x384xf32> to vector<8x256xf32>
    %148 = vector.extract_strided_slice %146 {offsets = [0, 0], sizes = [8, 256], strides = [1, 1]} : vector<8x384xf32> to vector<8x256xf32>
    %149 = arith.addf %147, %148 : vector<8x256xf32>
    %150 = arith.negf %149 : vector<8x256xf32>
    %151 = math.exp %150 : vector<8x256xf32>
    %cst_40 = arith.constant 1.000000e+00 : f32
    %152 = vector.broadcast %cst_40 : f32 to vector<8x256xf32>
    %153 = arith.addf %152, %151 : vector<8x256xf32>
    %154 = arith.divf %152, %153 : vector<8x256xf32>
    %155 = vector.extract_strided_slice %154 {offsets = [0, 0], sizes = [8, 128], strides = [1, 1]} : vector<8x256xf32> to vector<8x128xf32>
    %156 = vector.extract_strided_slice %154 {offsets = [0, 128], sizes = [8, 128], strides = [1, 1]} : vector<8x256xf32> to vector<8x128xf32>
    %157 = vector.extract_strided_slice %145 {offsets = [0, 256], sizes = [8, 128], strides = [1, 1]} : vector<8x384xf32> to vector<8x128xf32>
    %158 = vector.extract_strided_slice %146 {offsets = [0, 256], sizes = [8, 128], strides = [1, 1]} : vector<8x384xf32> to vector<8x128xf32>
    %159 = arith.addf %158, %10 : vector<8x128xf32>
    %160 = arith.mulf %155, %159 : vector<8x128xf32>
    %161 = arith.addf %157, %160 : vector<8x128xf32>
    %162 = math.tanh %161 : vector<8x128xf32>
    %163 = arith.subf %139, %162 : vector<8x128xf32>
    %164 = arith.mulf %156, %163 : vector<8x128xf32>
    %165 = arith.addf %162, %164 : vector<8x128xf32>
    %166 = arith.index_cast %143 : i32 to index
    %c0_41 = arith.constant 0 : index
    %167 = vector.load %arg11[%166, %c0_41] : memref<64x128xf32, #tpu.memory_space<vmem>>, vector<8x128xf32>
    tpu.vector_store %arg11[%166, %c0_41], %165 {strides = array<i32>} : memref<64x128xf32, #tpu.memory_space<vmem>>, vector<8x128xf32>,
    %c6_i32 = arith.constant 6 : i32
    %c8_i32_42 = arith.constant 8 : i32
    %168 = arith.muli %c6_i32, %c8_i32_42 : i32
    %169 = tpu.assume_multiple %168, 8 : i32
    %170 = arith.index_cast %169 : i32 to index
    %c0_43 = arith.constant 0 : index
    %171 = vector.load %arg10[%170, %c0_43] : memref<64x384xf32, #tpu.memory_space<vmem>>, vector<8x384xf32>
    %cst_44 = arith.constant dense<0.000000e+00> : vector<8x384xf32>
    %172 = tpu.matmul %165, %7, %cst_44 {dimension_numbers = #tpu.dot_dimension_numbers<[1], [0], [0], [1], [0, 0, 1, 1], [], []>} : vector<8x128xf32>, vector<128x384xf32>, vector<8x384xf32> -> vector<8x384xf32>
    %173 = vector.extract_strided_slice %171 {offsets = [0, 0], sizes = [8, 256], strides = [1, 1]} : vector<8x384xf32> to vector<8x256xf32>
    %174 = vector.extract_strided_slice %172 {offsets = [0, 0], sizes = [8, 256], strides = [1, 1]} : vector<8x384xf32> to vector<8x256xf32>
    %175 = arith.addf %173, %174 : vector<8x256xf32>
    %176 = arith.negf %175 : vector<8x256xf32>
    %177 = math.exp %176 : vector<8x256xf32>
    %cst_45 = arith.constant 1.000000e+00 : f32
    %178 = vector.broadcast %cst_45 : f32 to vector<8x256xf32>
    %179 = arith.addf %178, %177 : vector<8x256xf32>
    %180 = arith.divf %178, %179 : vector<8x256xf32>
    %181 = vector.extract_strided_slice %180 {offsets = [0, 0], sizes = [8, 128], strides = [1, 1]} : vector<8x256xf32> to vector<8x128xf32>
    %182 = vector.extract_strided_slice %180 {offsets = [0, 128], sizes = [8, 128], strides = [1, 1]} : vector<8x256xf32> to vector<8x128xf32>
    %183 = vector.extract_strided_slice %171 {offsets = [0, 256], sizes = [8, 128], strides = [1, 1]} : vector<8x384xf32> to vector<8x128xf32>
    %184 = vector.extract_strided_slice %172 {offsets = [0, 256], sizes = [8, 128], strides = [1, 1]} : vector<8x384xf32> to vector<8x128xf32>
    %185 = arith.addf %184, %10 : vector<8x128xf32>
    %186 = arith.mulf %181, %185 : vector<8x128xf32>
    %187 = arith.addf %183, %186 : vector<8x128xf32>
    %188 = math.tanh %187 : vector<8x128xf32>
    %189 = arith.subf %165, %188 : vector<8x128xf32>
    %190 = arith.mulf %182, %189 : vector<8x128xf32>
    %191 = arith.addf %188, %190 : vector<8x128xf32>
    %192 = arith.index_cast %169 : i32 to index
    %c0_46 = arith.constant 0 : index
    %193 = vector.load %arg11[%192, %c0_46] : memref<64x128xf32, #tpu.memory_space<vmem>>, vector<8x128xf32>
    tpu.vector_store %arg11[%192, %c0_46], %191 {strides = array<i32>} : memref<64x128xf32, #tpu.memory_space<vmem>>, vector<8x128xf32>,
    %c7_i32 = arith.constant 7 : i32
    %c8_i32_47 = arith.constant 8 : i32
    %194 = arith.muli %c7_i32, %c8_i32_47 : i32
    %195 = tpu.assume_multiple %194, 8 : i32
    %196 = arith.index_cast %195 : i32 to index
    %c0_48 = arith.constant 0 : index
    %197 = vector.load %arg10[%196, %c0_48] : memref<64x384xf32, #tpu.memory_space<vmem>>, vector<8x384xf32>
    %cst_49 = arith.constant dense<0.000000e+00> : vector<8x384xf32>
    %198 = tpu.matmul %191, %7, %cst_49 {dimension_numbers = #tpu.dot_dimension_numbers<[1], [0], [0], [1], [0, 0, 1, 1], [], []>} : vector<8x128xf32>, vector<128x384xf32>, vector<8x384xf32> -> vector<8x384xf32>
    %199 = vector.extract_strided_slice %197 {offsets = [0, 0], sizes = [8, 256], strides = [1, 1]} : vector<8x384xf32> to vector<8x256xf32>
    %200 = vector.extract_strided_slice %198 {offsets = [0, 0], sizes = [8, 256], strides = [1, 1]} : vector<8x384xf32> to vector<8x256xf32>
    %201 = arith.addf %199, %200 : vector<8x256xf32>
    %202 = arith.negf %201 : vector<8x256xf32>
    %203 = math.exp %202 : vector<8x256xf32>
    %cst_50 = arith.constant 1.000000e+00 : f32
    %204 = vector.broadcast %cst_50 : f32 to vector<8x256xf32>
    %205 = arith.addf %204, %203 : vector<8x256xf32>
    %206 = arith.divf %204, %205 : vector<8x256xf32>
    %207 = vector.extract_strided_slice %206 {offsets = [0, 0], sizes = [8, 128], strides = [1, 1]} : vector<8x256xf32> to vector<8x128xf32>
    %208 = vector.extract_strided_slice %206 {offsets = [0, 128], sizes = [8, 128], strides = [1, 1]} : vector<8x256xf32> to vector<8x128xf32>
    %209 = vector.extract_strided_slice %197 {offsets = [0, 256], sizes = [8, 128], strides = [1, 1]} : vector<8x384xf32> to vector<8x128xf32>
    %210 = vector.extract_strided_slice %198 {offsets = [0, 256], sizes = [8, 128], strides = [1, 1]} : vector<8x384xf32> to vector<8x128xf32>
    %211 = arith.addf %210, %10 : vector<8x128xf32>
    %212 = arith.mulf %207, %211 : vector<8x128xf32>
    %213 = arith.addf %209, %212 : vector<8x128xf32>
    %214 = math.tanh %213 : vector<8x128xf32>
    %215 = arith.subf %191, %214 : vector<8x128xf32>
    %216 = arith.mulf %208, %215 : vector<8x128xf32>
    %217 = arith.addf %214, %216 : vector<8x128xf32>
    %218 = arith.index_cast %195 : i32 to index
    %c0_51 = arith.constant 0 : index
    %219 = vector.load %arg11[%218, %c0_51] : memref<64x128xf32, #tpu.memory_space<vmem>>, vector<8x128xf32>
    tpu.vector_store %arg11[%218, %c0_51], %217 {strides = array<i32>} : memref<64x128xf32, #tpu.memory_space<vmem>>, vector<8x128xf32>,
    %c8_i32_52 = arith.constant 8 : i32
    %c0_53 = arith.constant 0 : index
    %c0_54 = arith.constant 0 : index
    %220 = vector.load %arg9[%c0_53, %c0_54] : memref<8x128xf32, #tpu.memory_space<vmem>>, vector<8x128xf32>
    tpu.vector_store %arg9[%c0_53, %c0_54], %217 {strides = array<i32>} : memref<8x128xf32, #tpu.memory_space<vmem>>, vector<8x128xf32>,
    %c0_55 = arith.constant 0 : index
    %c0_56 = arith.constant 0 : index
    %221 = vector.load %arg11[%c0_55, %c0_56] : memref<64x128xf32, #tpu.memory_space<vmem>>, vector<64x128xf32>
    %c0_57 = arith.constant 0 : index
    %c0_58 = arith.constant 0 : index
    %222 = vector.load %arg6[%c0_57, %c0_58] : memref<128x128xf32, #tpu.memory_space<vmem>>, vector<128x128xf32>
    %cst_59 = arith.constant dense<0.000000e+00> : vector<64x128xf32>
    %223 = tpu.matmul %221, %222, %cst_59 {dimension_numbers = #tpu.dot_dimension_numbers<[1], [0], [0], [1], [0, 0, 1, 1], [], []>} : vector<64x128xf32>, vector<128x128xf32>, vector<64x128xf32> -> vector<64x128xf32>
    %c0_60 = arith.constant 0 : index
    %c0_61 = arith.constant 0 : index
    %224 = vector.load %arg7[%c0_60, %c0_61] : memref<1x128xf32, #tpu.memory_space<vmem>>, vector<1x128xf32>
    %225 = vector.broadcast %224 : vector<1x128xf32> to vector<64x128xf32>
    %226 = arith.addf %223, %225 : vector<64x128xf32>
    %227 = math.exp %226 : vector<64x128xf32>
    %c0_62 = arith.constant 0 : index
    %c0_63 = arith.constant 0 : index
    %228 = vector.load %arg8[%c0_62, %c0_63] : memref<64x128xf32, #tpu.memory_space<vmem>>, vector<64x128xf32>
    tpu.vector_store %arg8[%c0_62, %c0_63], %227 {strides = array<i32>} : memref<64x128xf32, #tpu.memory_space<vmem>>, vector<64x128xf32>,
    return
  }
}

</mosaic_0001>

<llo_original>
// kernel: decoder_forward.1
$region0: #{decoder_forward.1}
  #allocation0 [shape = 'u32[]', space=smem, size = 0x4, offset = 0x4, fixed_abs, tag = 'smem constant byte address 0x4 - core index']
  #allocation1 [shape = 'u32[144,128]{1,0:T(1,128)}', space=vmem, size = 0x12000, scoped, tag = 'internal scratch']
  #allocation2 [shape = 'f32[64,384]{1,0:T(8,128)}', space=vmem, size = 0x18000, scoped, tag = 'scratch operand']
  #allocation3 [shape = 'f32[64,128]{1,0:T(8,128)}', space=vmem, size = 0x8000, scoped, tag = 'scratch operand']
  %s0 = inlined_call_operand.vmem [shape: f32[64,3], index: 0, kind: input, shape index: {}]
  %s1 = inlined_call_operand.vmem [shape: f32[8,128], index: 1, kind: input, shape index: {}]
  %s2 = inlined_call_operand.vmem [shape: f32[3,384], index: 2, kind: input, shape index: {}]
  %s3 = inlined_call_operand.vmem [shape: f32[128,384], index: 3, kind: input, shape index: {}]
  %s4 = inlined_call_operand.vmem [shape: f32[1,384], index: 4, kind: input, shape index: {}]
  %s5 = inlined_call_operand.vmem [shape: f32[1,128], index: 5, kind: input, shape index: {}]
  %s6 = inlined_call_operand.vmem [shape: f32[128,128], index: 6, kind: input, shape index: {}]
  %s7 = inlined_call_operand.vmem [shape: f32[1,128], index: 7, kind: input, shape index: {}]
  %s8 = inlined_call_operand.vmem [shape: f32[64,128], index: 8, kind: output, shape index: {0}]
  %s9 = inlined_call_operand.vmem [shape: f32[8,128], index: 9, kind: output, shape index: {1}]
  %10 = xla_tuple %s8, %s9
  %s11 = sld [smem:[#allocation0]]
  $region50: #{decoder_forward.1} parent=0
    _
  %s13 = ssub.s32 1, %s11
  %s14 = scalar_select 0, %s13, %s11
  // Predicated region
  $region2: #{decoder_forward.1} parent=0 // pred_check
    _
  $region3: #{decoder_forward.1} parent=0 // pred_check_branch
    %16 = sbr.rel (0) target = $region5
  $region4: #{decoder_forward.1} parent=0 // pred_region
    _
  $region5: #{decoder_forward.1} parent=0 // pred_fallthru
    _
  // Predicated region
  $region6: #{decoder_forward.1} parent=0 // pred_check
    _
  $region7: #{decoder_forward.1} parent=0 // pred_check_branch
    %18 = sbr.rel (0) target = $region9
  $region8: #{decoder_forward.1} parent=0 // pred_region
    _
  $region9: #{decoder_forward.1} parent=0 // pred_fallthru
    _
  // Predicated region
  $region10: #{decoder_forward.1} parent=0 // pred_check
    _
  $region11: #{decoder_forward.1} parent=0 // pred_check_branch
    %20 = sbr.rel (0) target = $region13
  $region12: #{decoder_forward.1} parent=0 // pred_region
    _
  $region13: #{decoder_forward.1} parent=0 // pred_fallthru
    _
  // Predicated region
  $region14: #{decoder_forward.1} parent=0 // pred_check
    _
  $region15: #{decoder_forward.1} parent=0 // pred_check_branch
    %22 = sbr.rel (0) target = $region17
  $region16: #{decoder_forward.1} parent=0 // pred_region
    _
  $region17: #{decoder_forward.1} parent=0 // pred_fallthru
    _
  // Predicated region
  $region18: #{decoder_forward.1} parent=0 // pred_check
    _
  $region19: #{decoder_forward.1} parent=0 // pred_check_branch
    %24 = sbr.rel (0) target = $region21
  $region20: #{decoder_forward.1} parent=0 // pred_region
    _
  $region21: #{decoder_forward.1} parent=0 // pred_fallthru
    _
  // Predicated region
  $region22: #{decoder_forward.1} parent=0 // pred_check
    _
  $region23: #{decoder_forward.1} parent=0 // pred_check_branch
    %26 = sbr.rel (0) target = $region25
  $region24: #{decoder_forward.1} parent=0 // pred_region
    _
  $region25: #{decoder_forward.1} parent=0 // pred_fallthru
    _
  // Predicated region
  $region26: #{decoder_forward.1} parent=0 // pred_check
    _
  $region27: #{decoder_forward.1} parent=0 // pred_check_branch
    %28 = sbr.rel (0) target = $region29
  $region28: #{decoder_forward.1} parent=0 // pred_region
    _
  $region29: #{decoder_forward.1} parent=0 // pred_fallthru
    _
  // Predicated region
  $region30: #{decoder_forward.1} parent=0 // pred_check
    _
  $region31: #{decoder_forward.1} parent=0 // pred_check_branch
    %30 = sbr.rel (0) target = $region33
  $region32: #{decoder_forward.1} parent=0 // pred_region
    _
  $region33: #{decoder_forward.1} parent=0 // pred_fallthru
    _
  %v31 = vld [vmem:[%s0] sm:$0xff]
  %v32 = vld [vmem:[%s0 + $0x8] sm:$0xff]
  %v33 = vld [vmem:[%s0 + $0x10] sm:$0xff]
  %v34 = vld [vmem:[%s0 + $0x18] sm:$0xff]
  %v35 = vld [vmem:[%s0 + $0x20] sm:$0xff]
  %v36 = vld [vmem:[%s0 + $0x28] sm:$0xff]
  %v37 = vld [vmem:[%s0 + $0x30] sm:$0xff]
  %v38 = vld [vmem:[%s0 + $0x38] sm:$0xff]
  %v39 = vld [vmem:[%s2] sm:$0x77]
  %v40 = vld [vmem:[%s2 + $0x8] sm:$0x7]
  %v41 = vld [vmem:[%s4] sm:$0x7]
  %v43 = vlaneseq
  %v44 = vshrl.u32 %v43, 7
  %v45 = vsub.s32 0, %v44
  %v46 = vrot.slane %v41, %v45
  %v47 = vlaneseq
  %v48 = vshrl.u32 %v47, 7
  %v49 = vsub.s32 1, %v48
  %v50 = vrot.slane %v41, %v49
  %v51 = vlaneseq
  %v52 = vshrl.u32 %v51, 7
  %v53 = vsub.s32 2, %v52
  %v54 = vrot.slane %v41, %v53
  %v60 = vcombine.high %v39, %v39
  %vm61 = vcmask 23552
  %v63 = vsel %vm61, %v31, 0
  %v66 = vsel %vm61, %v32, 0
  %v69 = vsel %vm61, %v33, 0
  %v72 = vsel %vm61, %v34, 0
  %v75 = vsel %vm61, %v35, 0
  %v78 = vsel %vm61, %v36, 0
  %v81 = vsel %vm61, %v37, 0
  %v84 = vsel %vm61, %v38, 0
  %vm86 = vcmask 1042432
  %v87 = vsel %vm86, %v39, 0
  %v89 = vsel %vm86, %v60, 0
  %v91 = vsel %vm86, %v40, 0
  %93 = vmatprep.subr.mxu0 %v89
  %94 = vmatpush1.msra.mxu0 %v87
  %95 = vmatprep.subr.mxu0 0.0
  %96 = vmatpush1.msra.mxu0 0.0
  %97 = vmatprep.subr.mxu0 0.0
  %98 = vmatpush1.msra.mxu0 0.0
  %99 = vmatprep.subr.mxu0 0.0
  %100 = vmatpush1.msra.mxu0 0.0
  %101 = vmatprep.subr.mxu0 0.0
  %102 = vmatpush1.msra.mxu0 0.0
  %103 = vmatprep.subr.mxu0 0.0
  %104 = vmatpush1.msra.mxu0 0.0
  %105 = vmatprep.subr.mxu0 0.0
  %106 = vmatpush1.msra.mxu0 0.0
  %107 = vmatprep.subr.mxu0 0.0
  %108 = vmatpush1.msra.mxu0 0.0
  %109 = vmatprep.subr.mxu0 0.0
  %110 = vmatpush1.msra.mxu0 0.0
  %111 = vmatprep.subr.mxu0 0.0
  %112 = vmatpush1.msra.mxu0 0.0
  %113 = vmatprep.subr.mxu0 0.0
  %114 = vmatpush1.msra.mxu0 0.0
  %115 = vmatprep.subr.mxu0 0.0
  %116 = vmatpush1.msra.mxu0 0.0
  %117 = vmatprep.subr.mxu0 0.0
  %118 = vmatpush1.msra.mxu0 0.0
  %119 = vmatprep.subr.mxu0 0.0
  %120 = vmatpush1.msra.mxu0 0.0
  %121 = vmatprep.subr.mxu0 0.0
  %122 = vmatpush1.msra.mxu0 0.0
  %123 = vmatprep.subr.mxu0 0.0
  %124 = vmatpush1.msra.mxu0 0.0
  %125 = vmatprep.subr.mxu0 0.0
  %126 = vmatpush1.msra.mxu0 0.0
  %127 = vmatprep.subr.mxu0 0.0
  %128 = vmatpush1.msra.mxu0 0.0
  %129 = vmatprep.subr.mxu0 0.0
  %130 = vmatpush1.msra.mxu0 0.0
  %131 = vmatprep.subr.mxu0 0.0
  %132 = vmatpush1.msra.mxu0 0.0
  %133 = vmatprep.subr.mxu0 0.0
  %134 = vmatpush1.msra.mxu0 0.0
  %135 = vmatprep.subr.mxu0 0.0
  %136 = vmatpush1.msra.mxu0 0.0
  %137 = vmatprep.subr.mxu0 0.0
  %138 = vmatpush1.msra.mxu0 0.0
  %139 = vmatprep.subr.mxu0 0.0
  %140 = vmatpush1.msra.mxu0 0.0
  %141 = vmatprep.subr.mxu0 0.0
  %142 = vmatpush1.msra.mxu0 0.0
  %143 = vmatprep.subr.mxu0 0.0
  %144 = vmatpush1.msra.mxu0 0.0
  %145 = vmatprep.subr.mxu0 0.0
  %146 = vmatpush1.msra.mxu0 0.0
  %147 = vmatprep.subr.mxu0 0.0
  %148 = vmatpush1.msra.mxu0 0.0
  %149 = vmatprep.subr.mxu0 0.0
  %150 = vmatpush1.msra.mxu0 0.0
  %151 = vmatprep.subr.mxu0 0.0
  %152 = vmatpush1.msra.mxu0 0.0
  %153 = vmatprep.subr.mxu0 0.0
  %154 = vmatpush1.msra.mxu0 0.0
  %155 = vmatprep.subr.mxu0 0.0
  %156 = vmatpush1.msra.mxu0 0.0
  %157 = vmatprep.mubr.f32.mxu0 0.0
  %158 = vmatmul.mubr.f32.gmra.mrb[0].mxu0 %v63
  %v159 = vpop.f32.mrb[0].mxu0
  %v160 = vadd.f32 %v46, %v159
  %v161 = vpop.f32.mrb[0].mxu0
  %v162 = vadd.f32 %v50, %v161
  %163 = vmatprep.mubr.f32.mxu0 0.0
  %164 = vmatmul.mubr.f32.gmra.mrb[0].mxu0 %v66
  %v165 = vpop.f32.mrb[0].mxu0
  %v166 = vadd.f32 %v46, %v165
  %v167 = vpop.f32.mrb[0].mxu0
  %v168 = vadd.f32 %v50, %v167
  %169 = vmatprep.mubr.f32.mxu0 0.0
  %170 = vmatmul.mubr.f32.gmra.mrb[0].mxu0 %v69
  %v171 = vpop.f32.mrb[0].mxu0
  %v172 = vadd.f32 %v46, %v171
  %v173 = vpop.f32.mrb[0].mxu0
  %v174 = vadd.f32 %v50, %v173
  %175 = vmatprep.mubr.f32.mxu0 0.0
  %176 = vmatmul.mubr.f32.gmra.mrb[0].mxu0 %v72
  %v177 = vpop.f32.mrb[0].mxu0
  %v178 = vadd.f32 %v46, %v177
  %v179 = vpop.f32.mrb[0].mxu0
  %v180 = vadd.f32 %v50, %v179
  %181 = vmatprep.mubr.f32.mxu0 0.0
  %182 = vmatmul.mubr.f32.gmra.mrb[0].mxu0 %v75
  %v183 = vpop.f32.mrb[0].mxu0
  %v184 = vadd.f32 %v46, %v183
  %v185 = vpop.f32.mrb[0].mxu0
  %v186 = vadd.f32 %v50, %v185
  %187 = vmatprep.mubr.f32.mxu0 0.0
  %188 = vmatmul.mubr.f32.gmra.mrb[0].mxu0 %v78
  %v189 = vpop.f32.mrb[0].mxu0
  %v190 = vadd.f32 %v46, %v189
  %v191 = vpop.f32.mrb[0].mxu0
  %v192 = vadd.f32 %v50, %v191
  %193 = vmatprep.mubr.f32.mxu0 0.0
  %194 = vmatmul.mubr.f32.gmra.mrb[0].mxu0 %v81
  %v195 = vpop.f32.mrb[0].mxu0
  %v196 = vadd.f32 %v46, %v195
  %v197 = vpop.f32.mrb[0].mxu0
  %v198 = vadd.f32 %v50, %v197
  %199 = vmatprep.mubr.f32.mxu0 0.0
  %200 = vmatmul.mubr.f32.gmra.mrb[0].mxu0 %v84
  %v201 = vpop.f32.mrb[0].mxu0
  %v202 = vadd.f32 %v46, %v201
  %v203 = vpop.f32.mrb[0].mxu0
  %v204 = vadd.f32 %v50, %v203
  %205 = vdwg.mxu0
  %206 = vmatprep.subr.mxu0 0.0
  %207 = vmatpush1.msra.mxu0 %v91
  %208 = vmatprep.subr.mxu0 0.0
  %209 = vmatpush1.msra.mxu0 0.0
  %210 = vmatprep.subr.mxu0 0.0
  %211 = vmatpush1.msra.mxu0 0.0
  %212 = vmatprep.subr.mxu0 0.0
  %213 = vmatpush1.msra.mxu0 0.0
  %214 = vmatprep.subr.mxu0 0.0
  %215 = vmatpush1.msra.mxu0 0.0
  %216 = vmatprep.subr.mxu0 0.0
  %217 = vmatpush1.msra.mxu0 0.0
  %218 = vmatprep.subr.mxu0 0.0
  %219 = vmatpush1.msra.mxu0 0.0
  %220 = vmatprep.subr.mxu0 0.0
  %221 = vmatpush1.msra.mxu0 0.0
  %222 = vmatprep.subr.mxu0 0.0
  %223 = vmatpush1.msra.mxu0 0.0
  %224 = vmatprep.subr.mxu0 0.0
  %225 = vmatpush1.msra.mxu0 0.0
  %226 = vmatprep.subr.mxu0 0.0
  %227 = vmatpush1.msra.mxu0 0.0
  %228 = vmatprep.subr.mxu0 0.0
  %229 = vmatpush1.msra.mxu0 0.0
  %230 = vmatprep.subr.mxu0 0.0
  %231 = vmatpush1.msra.mxu0 0.0
  %232 = vmatprep.subr.mxu0 0.0
  %233 = vmatpush1.msra.mxu0 0.0
  %234 = vmatprep.subr.mxu0 0.0
  %235 = vmatpush1.msra.mxu0 0.0
  %236 = vmatprep.subr.mxu0 0.0
  %237 = vmatpush1.msra.mxu0 0.0
  %238 = vmatprep.subr.mxu0 0.0
  %239 = vmatpush1.msra.mxu0 0.0
  %240 = vmatprep.subr.mxu0 0.0
  %241 = vmatpush1.msra.mxu0 0.0
  %242 = vmatprep.subr.mxu0 0.0
  %243 = vmatpush1.msra.mxu0 0.0
  %244 = vmatprep.subr.mxu0 0.0
  %245 = vmatpush1.msra.mxu0 0.0
  %246 = vmatprep.subr.mxu0 0.0
  %247 = vmatpush1.msra.mxu0 0.0
  %248 = vmatprep.subr.mxu0 0.0
  %249 = vmatpush1.msra.mxu0 0.0
  %250 = vmatprep.subr.mxu0 0.0
  %251 = vmatpush1.msra.mxu0 0.0
  %252 = vmatprep.subr.mxu0 0.0
  %253 = vmatpush1.msra.mxu0 0.0
  %254 = vmatprep.subr.mxu0 0.0
  %255 = vmatpush1.msra.mxu0 0.0
  %256 = vmatprep.subr.mxu0 0.0
  %257 = vmatpush1.msra.mxu0 0.0
  %258 = vmatprep.subr.mxu0 0.0
  %259 = vmatpush1.msra.mxu0 0.0
  %260 = vmatprep.subr.mxu0 0.0
  %261 = vmatpush1.msra.mxu0 0.0
  %262 = vmatprep.subr.mxu0 0.0
  %263 = vmatpush1.msra.mxu0 0.0
  %264 = vmatprep.subr.mxu0 0.0
  %265 = vmatpush1.msra.mxu0 0.0
  %266 = vmatprep.subr.mxu0 0.0
  %267 = vmatpush1.msra.mxu0 0.0
  %268 = vmatprep.subr.mxu0 0.0
  %269 = vmatpush1.msra.mxu0 0.0
  %270 = vmatprep.mubr.f32.mxu0 0.0
  %271 = vmatmul.mubr.f32.gmra.mrb[0].mxu0 %v63
  %v272 = vpop.f32.mrb[0].mxu0
  %v273 = vadd.f32 %v54, %v272
  %v274 = vpop.f32.mrb[0].mxu0
  %275 = vmatprep.mubr.f32.mxu0 0.0
  %276 = vmatmul.mubr.f32.gmra.mrb[0].mxu0 %v66
  %v277 = vpop.f32.mrb[0].mxu0
  %v278 = vadd.f32 %v54, %v277
  %v279 = vpop.f32.mrb[0].mxu0
  %280 = vmatprep.mubr.f32.mxu0 0.0
  %281 = vmatmul.mubr.f32.gmra.mrb[0].mxu0 %v69
  %v282 = vpop.f32.mrb[0].mxu0
  %v283 = vadd.f32 %v54, %v282
  %v284 = vpop.f32.mrb[0].mxu0
  %285 = vmatprep.mubr.f32.mxu0 0.0
  %286 = vmatmul.mubr.f32.gmra.mrb[0].mxu0 %v72
  %v287 = vpop.f32.mrb[0].mxu0
  %v288 = vadd.f32 %v54, %v287
  %v289 = vpop.f32.mrb[0].mxu0
  %290 = vmatprep.mubr.f32.mxu0 0.0
  %291 = vmatmul.mubr.f32.gmra.mrb[0].mxu0 %v75
  %v292 = vpop.f32.mrb[0].mxu0
  %v293 = vadd.f32 %v54, %v292
  %v294 = vpop.f32.mrb[0].mxu0
  %295 = vmatprep.mubr.f32.mxu0 0.0
  %296 = vmatmul.mubr.f32.gmra.mrb[0].mxu0 %v78
  %v297 = vpop.f32.mrb[0].mxu0
  %v298 = vadd.f32 %v54, %v297
  %v299 = vpop.f32.mrb[0].mxu0
  %300 = vmatprep.mubr.f32.mxu0 0.0
  %301 = vmatmul.mubr.f32.gmra.mrb[0].mxu0 %v81
  %v302 = vpop.f32.mrb[0].mxu0
  %v303 = vadd.f32 %v54, %v302
  %v304 = vpop.f32.mrb[0].mxu0
  %305 = vmatprep.mubr.f32.mxu0 0.0
  %306 = vmatmul.mubr.f32.gmra.mrb[0].mxu0 %v84
  %v307 = vpop.f32.mrb[0].mxu0
  %v308 = vadd.f32 %v54, %v307
  %v309 = vpop.f32.mrb[0].mxu0
  %310 = vdwg.mxu0
  %311 = vst [vmem:[#allocation2] sm:$0xff] %v160
  %312 = vst [vmem:[#allocation2 + $0x8] sm:$0xff] %v162
  %313 = vst [vmem:[#allocation2 + $0x10] sm:$0xff] %v273
  %314 = vst [vmem:[#allocation2 + $0x18] sm:$0xff] %v166
  %315 = vst [vmem:[#allocation2 + $0x20] sm:$0xff] %v168
  %316 = vst [vmem:[#allocation2 + $0x28] sm:$0xff] %v278
  %317 = vst [vmem:[#allocation2 + $0x30] sm:$0xff] %v172
  %318 = vst [vmem:[#allocation2 + $0x38] sm:$0xff] %v174
  %319 = vst [vmem:[#allocation2 + $0x40] sm:$0xff] %v283
  %320 = vst [vmem:[#allocation2 + $0x48] sm:$0xff] %v178
  %321 = vst [vmem:[#allocation2 + $0x50] sm:$0xff] %v180
  %322 = vst [vmem:[#allocation2 + $0x58] sm:$0xff] %v288
  %323 = vst [vmem:[#allocation2 + $0x60] sm:$0xff] %v184
  %324 = vst [vmem:[#allocation2 + $0x68] sm:$0xff] %v186
  %325 = vst [vmem:[#allocation2 + $0x70] sm:$0xff] %v293
  %326 = vst [vmem:[#allocation2 + $0x78] sm:$0xff] %v190
  %327 = vst [vmem:[#allocation2 + $0x80] sm:$0xff] %v192
  %328 = vst [vmem:[#allocation2 + $0x88] sm:$0xff] %v298
  %329 = vst [vmem:[#allocation2 + $0x90] sm:$0xff] %v196
  %330 = vst [vmem:[#allocation2 + $0x98] sm:$0xff] %v198
  %331 = vst [vmem:[#allocation2 + $0xa0] sm:$0xff] %v303
  %332 = vst [vmem:[#allocation2 + $0xa8] sm:$0xff] %v202
  %333 = vst [vmem:[#allocation2 + $0xb0] sm:$0xff] %v204
  %334 = vst [vmem:[#allocation2 + $0xb8] sm:$0xff] %v308
  %v335 = vld [vmem:[%s3] sm:$0xff]
  %v336 = vld [vmem:[%s3 + $0x8] sm:$0xff]
  %v337 = vld [vmem:[%s3 + $0x10] sm:$0xff]
  %v338 = vld [vmem:[%s3 + $0x18] sm:$0xff]
  %v339 = vld [vmem:[%s3 + $0x20] sm:$0xff]
  %v340 = vld [vmem:[%s3 + $0x28] sm:$0xff]
  %v341 = vld [vmem:[%s3 + $0x30] sm:$0xff]
  %v342 = vld [vmem:[%s3 + $0x38] sm:$0xff]
  %v343 = vld [vmem:[%s3 + $0x40] sm:$0xff]
  %v344 = vld [vmem:[%s3 + $0x48] sm:$0xff]
  %v345 = vld [vmem:[%s3 + $0x50] sm:$0xff]
  %v346 = vld [vmem:[%s3 + $0x58] sm:$0xff]
  %v347 = vld [vmem:[%s3 + $0x60] sm:$0xff]
  %v348 = vld [vmem:[%s3 + $0x68] sm:$0xff]
  %v349 = vld [vmem:[%s3 + $0x70] sm:$0xff]
  %v350 = vld [vmem:[%s3 + $0x78] sm:$0xff]
  %v351 = vld [vmem:[%s3 + $0x80] sm:$0xff]
  %v352 = vld [vmem:[%s3 + $0x88] sm:$0xff]
  %v353 = vld [vmem:[%s3 + $0x90] sm:$0xff]
  %v354 = vld [vmem:[%s3 + $0x98] sm:$0xff]
  %v355 = vld [vmem:[%s3 + $0xa0] sm:$0xff]
  %v356 = vld [vmem:[%s3 + $0xa8] sm:$0xff]
  %v357 = vld [vmem:[%s3 + $0xb0] sm:$0xff]
  %v358 = vld [vmem:[%s3 + $0xb8] sm:$0xff]
  %v359 = vld [vmem:[%s3 + $0xc0] sm:$0xff]
  %v360 = vld [vmem:[%s3 + $0xc8] sm:$0xff]
  %v361 = vld [vmem:[%s3 + $0xd0] sm:$0xff]
  %v362 = vld [vmem:[%s3 + $0xd8] sm:$0xff]
  %v363 = vld [vmem:[%s3 + $0xe0] sm:$0xff]
  %v364 = vld [vmem:[%s3 + $0xe8] sm:$0xff]
  %v365 = vld [vmem:[%s3 + $0xf0] sm:$0xff]
  %v366 = vld [vmem:[%s3 + $0xf8] sm:$0xff]
  %v367 = vld [vmem:[%s3 + $0x100] sm:$0xff]
  %v368 = vld [vmem:[%s3 + $0x108] sm:$0xff]
  %v369 = vld [vmem:[%s3 + $0x110] sm:$0xff]
  %v370 = vld [vmem:[%s3 + $0x118] sm:$0xff]
  %v371 = vld [vmem:[%s3 + $0x120] sm:$0xff]
  %v372 = vld [vmem:[%s3 + $0x128] sm:$0xff]
  %v373 = vld [vmem:[%s3 + $0x130] sm:$0xff]
  %v374 = vld [vmem:[%s3 + $0x138] sm:$0xff]
  %v375 = vld [vmem:[%s3 + $0x140] sm:$0xff]
  %v376 = vld [vmem:[%s3 + $0x148] sm:$0xff]
  %v377 = vld [vmem:[%s3 + $0x150] sm:$0xff]
  %v378 = vld [vmem:[%s3 + $0x158] sm:$0xff]
  %v379 = vld [vmem:[%s3 + $0x160] sm:$0xff]
  %v380 = vld [vmem:[%s3 + $0x168] sm:$0xff]
  %v381 = vld [vmem:[%s3 + $0x170] sm:$0xff]
  %v382 = vld [vmem:[%s3 + $0x178] sm:$0xff]
  %v383 = vld [vmem:[%s5] sm:$0x1]
  %v385 = vlaneseq
  %v386 = vshrl.u32 %v385, 7
  %v387 = vsub.s32 0, %v386
  %v388 = vrot.slane %v383, %v387
  %v390 = vld [vmem:[%s1] sm:$0xff]
  %s391 = smul.u32 0, 3
  %s392 = smul.addr %s391, 8
  %s393 = scalar_lea.vmem [#allocation2], %s392
  %v394 = vld [vmem:[%s393] sm:$0xff]
  %v395 = vld [vmem:[%s393 + $0x8] sm:$0xff]
  %v396 = vld [vmem:[%s393 + $0x10] sm:$0xff]
  %397 = vmatprep.subr.mxu0 %v336
  %398 = vmatpush1.msra.mxu0 %v335
  %399 = vmatprep.subr.mxu0 %v339
  %400 = vmatpush1.msra.mxu0 %v338
  %401 = vmatprep.subr.mxu0 %v342
  %402 = vmatpush1.msra.mxu0 %v341
  %403 = vmatprep.subr.mxu0 %v345
  %404 = vmatpush1.msra.mxu0 %v344
  %405 = vmatprep.subr.mxu0 %v348
  %406 = vmatpush1.msra.mxu0 %v347
  %407 = vmatprep.subr.mxu0 %v351
  %408 = vmatpush1.msra.mxu0 %v350
  %409 = vmatprep.subr.mxu0 %v354
  %410 = vmatpush1.msra.mxu0 %v353
  %411 = vmatprep.subr.mxu0 %v357
  %412 = vmatpush1.msra.mxu0 %v356
  %413 = vmatprep.subr.mxu0 %v360
  %414 = vmatpush1.msra.mxu0 %v359
  %415 = vmatprep.subr.mxu0 %v363
  %416 = vmatpush1.msra.mxu0 %v362
  %417 = vmatprep.subr.mxu0 %v366
  %418 = vmatpush1.msra.mxu0 %v365
  %419 = vmatprep.subr.mxu0 %v369
  %420 = vmatpush1.msra.mxu0 %v368
  %421 = vmatprep.subr.mxu0 %v372
  %422 = vmatpush1.msra.mxu0 %v371
  %423 = vmatprep.subr.mxu0 %v375
  %424 = vmatpush1.msra.mxu0 %v374
  %425 = vmatprep.subr.mxu0 %v378
  %426 = vmatpush1.msra.mxu0 %v377
  %427 = vmatprep.subr.mxu0 %v381
  %428 = vmatpush1.msra.mxu0 %v380
  %429 = vmatprep.subr.mxu0 0.0
  %430 = vmatpush1.msra.mxu0 0.0
  %431 = vmatprep.subr.mxu0 0.0
  %432 = vmatpush1.msra.mxu0 0.0
  %433 = vmatprep.subr.mxu0 0.0
  %434 = vmatpush1.msra.mxu0 0.0
  %435 = vmatprep.subr.mxu0 0.0
  %436 = vmatpush1.msra.mxu0 0.0
  %437 = vmatprep.subr.mxu0 0.0
  %438 = vmatpush1.msra.mxu0 0.0
  %439 = vmatprep.subr.mxu0 0.0
  %440 = vmatpush1.msra.mxu0 0.0
  %441 = vmatprep.subr.mxu0 0.0
  %442 = vmatpush1.msra.mxu0 0.0
  %443 = vmatprep.subr.mxu0 0.0
  %444 = vmatpush1.msra.mxu0 0.0
  %445 = vmatprep.subr.mxu0 0.0
  %446 = vmatpush1.msra.mxu0 0.0
  %447 = vmatprep.subr.mxu0 0.0
  %448 = vmatpush1.msra.mxu0 0.0
  %449 = vmatprep.subr.mxu0 0.0
  %450 = vmatpush1.msra.mxu0 0.0
  %451 = vmatprep.subr.mxu0 0.0
  %452 = vmatpush1.msra.mxu0 0.0
  %453 = vmatprep.subr.mxu0 0.0
  %454 = vmatpush1.msra.mxu0 0.0
  %455 = vmatprep.subr.mxu0 0.0
  %456 = vmatpush1.msra.mxu0 0.0
  %457 = vmatprep.subr.mxu0 0.0
  %458 = vmatpush1.msra.mxu0 0.0
  %459 = vmatprep.subr.mxu0 0.0
  %460 = vmatpush1.msra.mxu0 0.0
  %461 = vmatprep.mubr.f32.mxu0 0.0
  %462 = vmatmul.mubr.f32.gmra.mrb[0].mxu0 %v390
  %v463 = vpop.f32.mrb[0].mxu0
  %v464 = vadd.f32 0.0, %v463
  %v465 = vpop.f32.mrb[0].mxu0
  %v466 = vadd.f32 0.0, %v465
  %467 = vdwg.mxu0
  %468 = vmatprep.subr.mxu0 0.0
  %469 = vmatpush1.msra.mxu0 %v337
  %470 = vmatprep.subr.mxu0 0.0
  %471 = vmatpush1.msra.mxu0 %v340
  %472 = vmatprep.subr.mxu0 0.0
  %473 = vmatpush1.msra.mxu0 %v343
  %474 = vmatprep.subr.mxu0 0.0
  %475 = vmatpush1.msra.mxu0 %v346
  %476 = vmatprep.subr.mxu0 0.0
  %477 = vmatpush1.msra.mxu0 %v349
  %478 = vmatprep.subr.mxu0 0.0
  %479 = vmatpush1.msra.mxu0 %v352
  %480 = vmatprep.subr.mxu0 0.0
  %481 = vmatpush1.msra.mxu0 %v355
  %482 = vmatprep.subr.mxu0 0.0
  %483 = vmatpush1.msra.mxu0 %v358
  %484 = vmatprep.subr.mxu0 0.0
  %485 = vmatpush1.msra.mxu0 %v361
  %486 = vmatprep.subr.mxu0 0.0
  %487 = vmatpush1.msra.mxu0 %v364
  %488 = vmatprep.subr.mxu0 0.0
  %489 = vmatpush1.msra.mxu0 %v367
  %490 = vmatprep.subr.mxu0 0.0
  %491 = vmatpush1.msra.mxu0 %v370
  %492 = vmatprep.subr.mxu0 0.0
  %493 = vmatpush1.msra.mxu0 %v373
  %494 = vmatprep.subr.mxu0 0.0
  %495 = vmatpush1.msra.mxu0 %v376
  %496 = vmatprep.subr.mxu0 0.0
  %497 = vmatpush1.msra.mxu0 %v379
  %498 = vmatprep.subr.mxu0 0.0
  %499 = vmatpush1.msra.mxu0 %v382
  %500 = vmatprep.subr.mxu0 0.0
  %501 = vmatpush1.msra.mxu0 0.0
  %502 = vmatprep.subr.mxu0 0.0
  %503 = vmatpush1.msra.mxu0 0.0
  %504 = vmatprep.subr.mxu0 0.0
  %505 = vmatpush1.msra.mxu0 0.0
  %506 = vmatprep.subr.mxu0 0.0
  %507 = vmatpush1.msra.mxu0 0.0
  %508 = vmatprep.subr.mxu0 0.0
  %509 = vmatpush1.msra.mxu0 0.0
  %510 = vmatprep.subr.mxu0 0.0
  %511 = vmatpush1.msra.mxu0 0.0
  %512 = vmatprep.subr.mxu0 0.0
  %513 = vmatpush1.msra.mxu0 0.0
  %514 = vmatprep.subr.mxu0 0.0
  %515 = vmatpush1.msra.mxu0 0.0
  %516 = vmatprep.subr.mxu0 0.0
  %517 = vmatpush1.msra.mxu0 0.0
  %518 = vmatprep.subr.mxu0 0.0
  %519 = vmatpush1.msra.mxu0 0.0
  %520 = vmatprep.subr.mxu0 0.0
  %521 = vmatpush1.msra.mxu0 0.0
  %522 = vmatprep.subr.mxu0 0.0
  %523 = vmatpush1.msra.mxu0 0.0
  %524 = vmatprep.subr.mxu0 0.0
  %525 = vmatpush1.msra.mxu0 0.0
  %526 = vmatprep.subr.mxu0 0.0
  %527 = vmatpush1.msra.mxu0 0.0
  %528 = vmatprep.subr.mxu0 0.0
  %529 = vmatpush1.msra.mxu0 0.0
  %530 = vmatprep.subr.mxu0 0.0
  %531 = vmatpush1.msra.mxu0 0.0
  %532 = vmatprep.mubr.f32.mxu0 0.0
  %533 = vmatmul.mubr.f32.gmra.mrb[0].mxu0 %v390
  %v534 = vpop.f32.mrb[0].mxu0
  %v535 = vadd.f32 0.0, %v534
  %v536 = vpop.f32.mrb[0].mxu0
  %537 = vdwg.mxu0
  %v538 = vadd.f32 %v394, %v464
  %v539 = vadd.f32 %v395, %v466
  %v540 = vxor.u32 %v538, 2147483648
  %v541 = vxor.u32 %v539, 2147483648
  %v542 = vmul.f32 %v540, 1.442695
  %v543 = vpow.pop %v542
  %v544 = vmul.f32 %v541, 1.442695
  %v545 = vpow.pop %v544
  %v546 = vadd.f32 %v543, 1.0
  %v547 = vadd.f32 %v545, 1.0
  %v548 = vrcp.pop %v546
  %v549 = vmul.f32 1.0, %v548
  %v550 = vrcp.pop %v547
  %v551 = vmul.f32 1.0, %v550
  %v552 = vadd.f32 %v535, %v388
  %v553 = vmul.f32 %v549, %v552
  %v554 = vadd.f32 %v396, %v553
  %v555 = vtanh.pop %v554
  %v556 = vsub.f32 %v390, %v555
  %v557 = vmul.f32 %v551, %v556
  %v558 = vadd.f32 %v555, %v557
  %559 = vst [vmem:[#allocation3] sm:$0xff] %v558
  %s560 = smul.u32 1, 3
  %s561 = smul.addr %s560, 8
  %s562 = scalar_lea.vmem [#allocation2], %s561
  %v563 = vld [vmem:[%s562] sm:$0xff]
  %v564 = vld [vmem:[%s562 + $0x8] sm:$0xff]
  %v565 = vld [vmem:[%s562 + $0x10] sm:$0xff]
  %566 = vmatprep.subr.mxu0 %v336
  %567 = vmatpush1.msra.mxu0 %v335
  %568 = vmatprep.subr.mxu0 %v339
  %569 = vmatpush1.msra.mxu0 %v338
  %570 = vmatprep.subr.mxu0 %v342
  %571 = vmatpush1.msra.mxu0 %v341
  %572 = vmatprep.subr.mxu0 %v345
  %573 = vmatpush1.msra.mxu0 %v344
  %574 = vmatprep.subr.mxu0 %v348
  %575 = vmatpush1.msra.mxu0 %v347
  %576 = vmatprep.subr.mxu0 %v351
  %577 = vmatpush1.msra.mxu0 %v350
  %578 = vmatprep.subr.mxu0 %v354
  %579 = vmatpush1.msra.mxu0 %v353
  %580 = vmatprep.subr.mxu0 %v357
  %581 = vmatpush1.msra.mxu0 %v356
  %582 = vmatprep.subr.mxu0 %v360
  %583 = vmatpush1.msra.mxu0 %v359
  %584 = vmatprep.subr.mxu0 %v363
  %585 = vmatpush1.msra.mxu0 %v362
  %586 = vmatprep.subr.mxu0 %v366
  %587 = vmatpush1.msra.mxu0 %v365
  %588 = vmatprep.subr.mxu0 %v369
  %589 = vmatpush1.msra.mxu0 %v368
  %590 = vmatprep.subr.mxu0 %v372
  %591 = vmatpush1.msra.mxu0 %v371
  %592 = vmatprep.subr.mxu0 %v375
  %593 = vmatpush1.msra.mxu0 %v374
  %594 = vmatprep.subr.mxu0 %v378
  %595 = vmatpush1.msra.mxu0 %v377
  %596 = vmatprep.subr.mxu0 %v381
  %597 = vmatpush1.msra.mxu0 %v380
  %598 = vmatprep.subr.mxu0 0.0
  %599 = vmatpush1.msra.mxu0 0.0
  %600 = vmatprep.subr.mxu0 0.0
  %601 = vmatpush1.msra.mxu0 0.0
  %602 = vmatprep.subr.mxu0 0.0
  %603 = vmatpush1.msra.mxu0 0.0
  %604 = vmatprep.subr.mxu0 0.0
  %605 = vmatpush1.msra.mxu0 0.0
  %606 = vmatprep.subr.mxu0 0.0
  %607 = vmatpush1.msra.mxu0 0.0
  %608 = vmatprep.subr.mxu0 0.0
  %609 = vmatpush1.msra.mxu0 0.0
  %610 = vmatprep.subr.mxu0 0.0
  %611 = vmatpush1.msra.mxu0 0.0
  %612 = vmatprep.subr.mxu0 0.0
  %613 = vmatpush1.msra.mxu0 0.0
  %614 = vmatprep.subr.mxu0 0.0
  %615 = vmatpush1.msra.mxu0 0.0
  %616 = vmatprep.subr.mxu0 0.0
  %617 = vmatpush1.msra.mxu0 0.0
  %618 = vmatprep.subr.mxu0 0.0
  %619 = vmatpush1.msra.mxu0 0.0
  %620 = vmatprep.subr.mxu0 0.0
  %621 = vmatpush1.msra.mxu0 0.0
  %622 = vmatprep.subr.mxu0 0.0
  %623 = vmatpush1.msra.mxu0 0.0
  %624 = vmatprep.subr.mxu0 0.0
  %625 = vmatpush1.msra.mxu0 0.0
  %626 = vmatprep.subr.mxu0 0.0
  %627 = vmatpush1.msra.mxu0 0.0
  %628 = vmatprep.subr.mxu0 0.0
  %629 = vmatpush1.msra.mxu0 0.0
  %630 = vmatprep.mubr.f32.mxu0 0.0
  %631 = vmatmul.mubr.f32.gmra.mrb[0].mxu0 %v558
  %v632 = vpop.f32.mrb[0].mxu0
  %v633 = vadd.f32 0.0, %v632
  %v634 = vpop.f32.mrb[0].mxu0
  %v635 = vadd.f32 0.0, %v634
  %636 = vdwg.mxu0
  %637 = vmatprep.subr.mxu0 0.0
  %638 = vmatpush1.msra.mxu0 %v337
  %639 = vmatprep.subr.mxu0 0.0
  %640 = vmatpush1.msra.mxu0 %v340
  %641 = vmatprep.subr.mxu0 0.0
  %642 = vmatpush1.msra.mxu0 %v343
  %643 = vmatprep.subr.mxu0 0.0
  %644 = vmatpush1.msra.mxu0 %v346
  %645 = vmatprep.subr.mxu0 0.0
  %646 = vmatpush1.msra.mxu0 %v349
  %647 = vmatprep.subr.mxu0 0.0
  %648 = vmatpush1.msra.mxu0 %v352
  %649 = vmatprep.subr.mxu0 0.0
  %650 = vmatpush1.msra.mxu0 %v355
  %651 = vmatprep.subr.mxu0 0.0
  %652 = vmatpush1.msra.mxu0 %v358
  %653 = vmatprep.subr.mxu0 0.0
  %654 = vmatpush1.msra.mxu0 %v361
  %655 = vmatprep.subr.mxu0 0.0
  %656 = vmatpush1.msra.mxu0 %v364
  %657 = vmatprep.subr.mxu0 0.0
  %658 = vmatpush1.msra.mxu0 %v367
  %659 = vmatprep.subr.mxu0 0.0
  %660 = vmatpush1.msra.mxu0 %v370
  %661 = vmatprep.subr.mxu0 0.0
  %662 = vmatpush1.msra.mxu0 %v373
  %663 = vmatprep.subr.mxu0 0.0
  %664 = vmatpush1.msra.mxu0 %v376
  %665 = vmatprep.subr.mxu0 0.0
  %666 = vmatpush1.msra.mxu0 %v379
  %667 = vmatprep.subr.mxu0 0.0
  %668 = vmatpush1.msra.mxu0 %v382
  %669 = vmatprep.subr.mxu0 0.0
  %670 = vmatpush1.msra.mxu0 0.0
  %671 = vmatprep.subr.mxu0 0.0
  %672 = vmatpush1.msra.mxu0 0.0
  %673 = vmatprep.subr.mxu0 0.0
  %674 = vmatpush1.msra.mxu0 0.0
  %675 = vmatprep.subr.mxu0 0.0
  %676 = vmatpush1.msra.mxu0 0.0
  %677 = vmatprep.subr.mxu0 0.0
  %678 = vmatpush1.msra.mxu0 0.0
  %679 = vmatprep.subr.mxu0 0.0
  %680 = vmatpush1.msra.mxu0 0.0
  %681 = vmatprep.subr.mxu0 0.0
  %682 = vmatpush1.msra.mxu0 0.0
  %683 = vmatprep.subr.mxu0 0.0
  %684 = vmatpush1.msra.mxu0 0.0
  %685 = vmatprep.subr.mxu0 0.0
  %686 = vmatpush1.msra.mxu0 0.0
  %687 = vmatprep.subr.mxu0 0.0
  %688 = vmatpush1.msra.mxu0 0.0
  %689 = vmatprep.subr.mxu0 0.0
  %690 = vmatpush1.msra.mxu0 0.0
  %691 = vmatprep.subr.mxu0 0.0
  %692 = vmatpush1.msra.mxu0 0.0
  %693 = vmatprep.subr.mxu0 0.0
  %694 = vmatpush1.msra.mxu0 0.0
  %695 = vmatprep.subr.mxu0 0.0
  %696 = vmatpush1.msra.mxu0 0.0
  %697 = vmatprep.subr.mxu0 0.0
  %698 = vmatpush1.msra.mxu0 0.0
  %699 = vmatprep.subr.mxu0 0.0
  %700 = vmatpush1.msra.mxu0 0.0
  %701 = vmatprep.mubr.f32.mxu0 0.0
  %702 = vmatmul.mubr.f32.gmra.mrb[0].mxu0 %v558
  %v703 = vpop.f32.mrb[0].mxu0
  %v704 = vadd.f32 0.0, %v703
  %v705 = vpop.f32.mrb[0].mxu0
  %706 = vdwg.mxu0
  %v707 = vadd.f32 %v563, %v633
  %v708 = vadd.f32 %v564, %v635
  %v709 = vxor.u32 %v707, 2147483648
  %v710 = vxor.u32 %v708, 2147483648
  %v711 = vmul.f32 %v709, 1.442695
  %v712 = vpow.pop %v711
  %v713 = vmul.f32 %v710, 1.442695
  %v714 = vpow.pop %v713
  %v715 = vadd.f32 %v712, 1.0
  %v716 = vadd.f32 %v714, 1.0
  %v717 = vrcp.pop %v715
  %v718 = vmul.f32 1.0, %v717
  %v719 = vrcp.pop %v716
  %v720 = vmul.f32 1.0, %v719
  %v721 = vadd.f32 %v704, %v388
  %v722 = vmul.f32 %v718, %v721
  %v723 = vadd.f32 %v565, %v722
  %v724 = vtanh.pop %v723
  %v725 = vsub.f32 %v558, %v724
  %v726 = vmul.f32 %v720, %v725
  %v727 = vadd.f32 %v724, %v726
  %s728 = scalar_lea.vmem [#allocation3], 8
  %729 = vst [vmem:[%s728] sm:$0xff] %v727
  %s730 = smul.u32 2, 3
  %s731 = smul.addr %s730, 8
  %s732 = scalar_lea.vmem [#allocation2], %s731
  %v733 = vld [vmem:[%s732] sm:$0xff]
  %v734 = vld [vmem:[%s732 + $0x8] sm:$0xff]
  %v735 = vld [vmem:[%s732 + $0x10] sm:$0xff]
  %736 = vmatprep.subr.mxu0 %v336
  %737 = vmatpush1.msra.mxu0 %v335
  %738 = vmatprep.subr.mxu0 %v339
  %739 = vmatpush1.msra.mxu0 %v338
  %740 = vmatprep.subr.mxu0 %v342
  %741 = vmatpush1.msra.mxu0 %v341
  %742 = vmatprep.subr.mxu0 %v345
  %743 = vmatpush1.msra.mxu0 %v344
  %744 = vmatprep.subr.mxu0 %v348
  %745 = vmatpush1.msra.mxu0 %v347
  %746 = vmatprep.subr.mxu0 %v351
  %747 = vmatpush1.msra.mxu0 %v350
  %748 = vmatprep.subr.mxu0 %v354
  %749 = vmatpush1.msra.mxu0 %v353
  %750 = vmatprep.subr.mxu0 %v357
  %751 = vmatpush1.msra.mxu0 %v356
  %752 = vmatprep.subr.mxu0 %v360
  %753 = vmatpush1.msra.mxu0 %v359
  %754 = vmatprep.subr.mxu0 %v363
  %755 = vmatpush1.msra.mxu0 %v362
  %756 = vmatprep.subr.mxu0 %v366
  %757 = vmatpush1.msra.mxu0 %v365
  %758 = vmatprep.subr.mxu0 %v369
  %759 = vmatpush1.msra.mxu0 %v368
  %760 = vmatprep.subr.mxu0 %v372
  %761 = vmatpush1.msra.mxu0 %v371
  %762 = vmatprep.subr.mxu0 %v375
  %763 = vmatpush1.msra.mxu0 %v374
  %764 = vmatprep.subr.mxu0 %v378
  %765 = vmatpush1.msra.mxu0 %v377
  %766 = vmatprep.subr.mxu0 %v381
  %767 = vmatpush1.msra.mxu0 %v380
  %768 = vmatprep.subr.mxu0 0.0
  %769 = vmatpush1.msra.mxu0 0.0
  %770 = vmatprep.subr.mxu0 0.0
  %771 = vmatpush1.msra.mxu0 0.0
  %772 = vmatprep.subr.mxu0 0.0
  %773 = vmatpush1.msra.mxu0 0.0
  %774 = vmatprep.subr.mxu0 0.0
  %775 = vmatpush1.msra.mxu0 0.0
  %776 = vmatprep.subr.mxu0 0.0
  %777 = vmatpush1.msra.mxu0 0.0
  %778 = vmatprep.subr.mxu0 0.0
  %779 = vmatpush1.msra.mxu0 0.0
  %780 = vmatprep.subr.mxu0 0.0
  %781 = vmatpush1.msra.mxu0 0.0
  %782 = vmatprep.subr.mxu0 0.0
  %783 = vmatpush1.msra.mxu0 0.0
  %784 = vmatprep.subr.mxu0 0.0
  %785 = vmatpush1.msra.mxu0 0.0
  %786 = vmatprep.subr.mxu0 0.0
  %787 = vmatpush1.msra.mxu0 0.0
  %788 = vmatprep.subr.mxu0 0.0
  %789 = vmatpush1.msra.mxu0 0.0
  %790 = vmatprep.subr.mxu0 0.0
  %791 = vmatpush1.msra.mxu0 0.0
  %792 = vmatprep.subr.mxu0 0.0
  %793 = vmatpush1.msra.mxu0 0.0
  %794 = vmatprep.subr.mxu0 0.0
  %795 = vmatpush1.msra.mxu0 0.0
  %796 = vmatprep.subr.mxu0 0.0
  %797 = vmatpush1.msra.mxu0 0.0
  %798 = vmatprep.subr.mxu0 0.0
  %799 = vmatpush1.msra.mxu0 0.0
  %800 = vmatprep.mubr.f32.mxu0 0.0
  %801 = vmatmul.mubr.f32.gmra.mrb[0].mxu0 %v727
  %v802 = vpop.f32.mrb[0].mxu0
  %v803 = vadd.f32 0.0, %v802
  %v804 = vpop.f32.mrb[0].mxu0
  %v805 = vadd.f32 0.0, %v804
  %806 = vdwg.mxu0
  %807 = vmatprep.subr.mxu0 0.0
  %808 = vmatpush1.msra.mxu0 %v337
  %809 = vmatprep.subr.mxu0 0.0
  %810 = vmatpush1.msra.mxu0 %v340
  %811 = vmatprep.subr.mxu0 0.0
  %812 = vmatpush1.msra.mxu0 %v343
  %813 = vmatprep.subr.mxu0 0.0
  %814 = vmatpush1.msra.mxu0 %v346
  %815 = vmatprep.subr.mxu0 0.0
  %816 = vmatpush1.msra.mxu0 %v349
  %817 = vmatprep.subr.mxu0 0.0
  %818 = vmatpush1.msra.mxu0 %v352
  %819 = vmatprep.subr.mxu0 0.0
  %820 = vmatpush1.msra.mxu0 %v355
  %821 = vmatprep.subr.mxu0 0.0
  %822 = vmatpush1.msra.mxu0 %v358
  %823 = vmatprep.subr.mxu0 0.0
  %824 = vmatpush1.msra.mxu0 %v361
  %825 = vmatprep.subr.mxu0 0.0
  %826 = vmatpush1.msra.mxu0 %v364
  %827 = vmatprep.subr.mxu0 0.0
  %828 = vmatpush1.msra.mxu0 %v367
  %829 = vmatprep.subr.mxu0 0.0
  %830 = vmatpush1.msra.mxu0 %v370
  %831 = vmatprep.subr.mxu0 0.0
  %832 = vmatpush1.msra.mxu0 %v373
  %833 = vmatprep.subr.mxu0 0.0
  %834 = vmatpush1.msra.mxu0 %v376
  %835 = vmatprep.subr.mxu0 0.0
  %836 = vmatpush1.msra.mxu0 %v379
  %837 = vmatprep.subr.mxu0 0.0
  %838 = vmatpush1.msra.mxu0 %v382
  %839 = vmatprep.subr.mxu0 0.0
  %840 = vmatpush1.msra.mxu0 0.0
  %841 = vmatprep.subr.mxu0 0.0
  %842 = vmatpush1.msra.mxu0 0.0
  %843 = vmatprep.subr.mxu0 0.0
  %844 = vmatpush1.msra.mxu0 0.0
  %845 = vmatprep.subr.mxu0 0.0
  %846 = vmatpush1.msra.mxu0 0.0
  %847 = vmatprep.subr.mxu0 0.0
  %848 = vmatpush1.msra.mxu0 0.0
  %849 = vmatprep.subr.mxu0 0.0
  %850 = vmatpush1.msra.mxu0 0.0
  %851 = vmatprep.subr.mxu0 0.0
  %852 = vmatpush1.msra.mxu0 0.0
  %853 = vmatprep.subr.mxu0 0.0
  %854 = vmatpush1.msra.mxu0 0.0
  %855 = vmatprep.subr.mxu0 0.0
  %856 = vmatpush1.msra.mxu0 0.0
  %857 = vmatprep.subr.mxu0 0.0
  %858 = vmatpush1.msra.mxu0 0.0
  %859 = vmatprep.subr.mxu0 0.0
  %860 = vmatpush1.msra.mxu0 0.0
  %861 = vmatprep.subr.mxu0 0.0
  %862 = vmatpush1.msra.mxu0 0.0
  %863 = vmatprep.subr.mxu0 0.0
  %864 = vmatpush1.msra.mxu0 0.0
  %865 = vmatprep.subr.mxu0 0.0
  %866 = vmatpush1.msra.mxu0 0.0
  %867 = vmatprep.subr.mxu0 0.0
  %868 = vmatpush1.msra.mxu0 0.0
  %869 = vmatprep.subr.mxu0 0.0
  %870 = vmatpush1.msra.mxu0 0.0
  %871 = vmatprep.mubr.f32.mxu0 0.0
  %872 = vmatmul.mubr.f32.gmra.mrb[0].mxu0 %v727
  %v873 = vpop.f32.mrb[0].mxu0
  %v874 = vadd.f32 0.0, %v873
  %v875 = vpop.f32.mrb[0].mxu0
  %876 = vdwg.mxu0
  %v877 = vadd.f32 %v733, %v803
  %v878 = vadd.f32 %v734, %v805
  %v879 = vxor.u32 %v877, 2147483648
  %v880 = vxor.u32 %v878, 2147483648
  %v881 = vmul.f32 %v879, 1.442695
  %v882 = vpow.pop %v881
  %v883 = vmul.f32 %v880, 1.442695
  %v884 = vpow.pop %v883
  %v885 = vadd.f32 %v882, 1.0
  %v886 = vadd.f32 %v884, 1.0
  %v887 = vrcp.pop %v885
  %v888 = vmul.f32 1.0, %v887
  %v889 = vrcp.pop %v886
  %v890 = vmul.f32 1.0, %v889
  %v891 = vadd.f32 %v874, %v388
  %v892 = vmul.f32 %v888, %v891
  %v893 = vadd.f32 %v735, %v892
  %v894 = vtanh.pop %v893
  %v895 = vsub.f32 %v727, %v894
  %v896 = vmul.f32 %v890, %v895
  %v897 = vadd.f32 %v894, %v896
  %s898 = scalar_lea.vmem [#allocation3], 16
  %899 = vst [vmem:[%s898] sm:$0xff] %v897
  %s900 = smul.u32 3, 3
  %s901 = smul.addr %s900, 8
  %s902 = scalar_lea.vmem [#allocation2], %s901
  %v903 = vld [vmem:[%s902] sm:$0xff]
  %v904 = vld [vmem:[%s902 + $0x8] sm:$0xff]
  %v905 = vld [vmem:[%s902 + $0x10] sm:$0xff]
  %906 = vmatprep.subr.mxu0 %v336
  %907 = vmatpush1.msra.mxu0 %v335
  %908 = vmatprep.subr.mxu0 %v339
  %909 = vmatpush1.msra.mxu0 %v338
  %910 = vmatprep.subr.mxu0 %v342
  %911 = vmatpush1.msra.mxu0 %v341
  %912 = vmatprep.subr.mxu0 %v345
  %913 = vmatpush1.msra.mxu0 %v344
  %914 = vmatprep.subr.mxu0 %v348
  %915 = vmatpush1.msra.mxu0 %v347
  %916 = vmatprep.subr.mxu0 %v351
  %917 = vmatpush1.msra.mxu0 %v350
  %918 = vmatprep.subr.mxu0 %v354
  %919 = vmatpush1.msra.mxu0 %v353
  %920 = vmatprep.subr.mxu0 %v357
  %921 = vmatpush1.msra.mxu0 %v356
  %922 = vmatprep.subr.mxu0 %v360
  %923 = vmatpush1.msra.mxu0 %v359
  %924 = vmatprep.subr.mxu0 %v363
  %925 = vmatpush1.msra.mxu0 %v362
  %926 = vmatprep.subr.mxu0 %v366
  %927 = vmatpush1.msra.mxu0 %v365
  %928 = vmatprep.subr.mxu0 %v369
  %929 = vmatpush1.msra.mxu0 %v368
  %930 = vmatprep.subr.mxu0 %v372
  %931 = vmatpush1.msra.mxu0 %v371
  %932 = vmatprep.subr.mxu0 %v375
  %933 = vmatpush1.msra.mxu0 %v374
  %934 = vmatprep.subr.mxu0 %v378
  %935 = vmatpush1.msra.mxu0 %v377
  %936 = vmatprep.subr.mxu0 %v381
  %937 = vmatpush1.msra.mxu0 %v380
  %938 = vmatprep.subr.mxu0 0.0
  %939 = vmatpush1.msra.mxu0 0.0
  %940 = vmatprep.subr.mxu0 0.0
  %941 = vmatpush1.msra.mxu0 0.0
  %942 = vmatprep.subr.mxu0 0.0
  %943 = vmatpush1.msra.mxu0 0.0
  %944 = vmatprep.subr.mxu0 0.0
  %945 = vmatpush1.msra.mxu0 0.0
  %946 = vmatprep.subr.mxu0 0.0
  %947 = vmatpush1.msra.mxu0 0.0
  %948 = vmatprep.subr.mxu0 0.0
  %949 = vmatpush1.msra.mxu0 0.0
  %950 = vmatprep.subr.mxu0 0.0
  %951 = vmatpush1.msra.mxu0 0.0
  %952 = vmatprep.subr.mxu0 0.0
  %953 = vmatpush1.msra.mxu0 0.0
  %954 = vmatprep.subr.mxu0 0.0
  %955 = vmatpush1.msra.mxu0 0.0
  %956 = vmatprep.subr.mxu0 0.0
  %957 = vmatpush1.msra.mxu0 0.0
  %958 = vmatprep.subr.mxu0 0.0
  %959 = vmatpush1.msra.mxu0 0.0
  %960 = vmatprep.subr.mxu0 0.0
  %961 = vmatpush1.msra.mxu0 0.0
  %962 = vmatprep.subr.mxu0 0.0
  %963 = vmatpush1.msra.mxu0 0.0
  %964 = vmatprep.subr.mxu0 0.0
  %965 = vmatpush1.msra.mxu0 0.0
  %966 = vmatprep.subr.mxu0 0.0
  %967 = vmatpush1.msra.mxu0 0.0
  %968 = vmatprep.subr.mxu0 0.0
  %969 = vmatpush1.msra.mxu0 0.0
  %970 = vmatprep.mubr.f32.mxu0 0.0
  %971 = vmatmul.mubr.f32.gmra.mrb[0].mxu0 %v897
  %v972 = vpop.f32.mrb[0].mxu0
  %v973 = vadd.f32 0.0, %v972
  %v974 = vpop.f32.mrb[0].mxu0
  %v975 = vadd.f32 0.0, %v974
  %976 = vdwg.mxu0
  %977 = vmatprep.subr.mxu0 0.0
  %978 = vmatpush1.msra.mxu0 %v337
  %979 = vmatprep.subr.mxu0 0.0
  %980 = vmatpush1.msra.mxu0 %v340
  %981 = vmatprep.subr.mxu0 0.0
  %982 = vmatpush1.msra.mxu0 %v343
  %983 = vmatprep.subr.mxu0 0.0
  %984 = vmatpush1.msra.mxu0 %v346
  %985 = vmatprep.subr.mxu0 0.0
  %986 = vmatpush1.msra.mxu0 %v349
  %987 = vmatprep.subr.mxu0 0.0
  %988 = vmatpush1.msra.mxu0 %v352
  %989 = vmatprep.subr.mxu0 0.0
  %990 = vmatpush1.msra.mxu0 %v355
  %991 = vmatprep.subr.mxu0 0.0
  %992 = vmatpush1.msra.mxu0 %v358
  %993 = vmatprep.subr.mxu0 0.0
  %994 = vmatpush1.msra.mxu0 %v361
  %995 = vmatprep.subr.mxu0 0.0
  %996 = vmatpush1.msra.mxu0 %v364
  %997 = vmatprep.subr.mxu0 0.0
  %998 = vmatpush1.msra.mxu0 %v367
  %999 = vmatprep.subr.mxu0 0.0
  %1000 = vmatpush1.msra.mxu0 %v370
  %1001 = vmatprep.subr.mxu0 0.0
  %1002 = vmatpush1.msra.mxu0 %v373
  %1003 = vmatprep.subr.mxu0 0.0
  %1004 = vmatpush1.msra.mxu0 %v376
  %1005 = vmatprep.subr.mxu0 0.0
  %1006 = vmatpush1.msra.mxu0 %v379
  %1007 = vmatprep.subr.mxu0 0.0
  %1008 = vmatpush1.msra.mxu0 %v382
  %1009 = vmatprep.subr.mxu0 0.0
  %1010 = vmatpush1.msra.mxu0 0.0
  %1011 = vmatprep.subr.mxu0 0.0
  %1012 = vmatpush1.msra.mxu0 0.0
  %1013 = vmatprep.subr.mxu0 0.0
  %1014 = vmatpush1.msra.mxu0 0.0
  %1015 = vmatprep.subr.mxu0 0.0
  %1016 = vmatpush1.msra.mxu0 0.0
  %1017 = vmatprep.subr.mxu0 0.0
  %1018 = vmatpush1.msra.mxu0 0.0
  %1019 = vmatprep.subr.mxu0 0.0
  %1020 = vmatpush1.msra.mxu0 0.0
  %1021 = vmatprep.subr.mxu0 0.0
  %1022 = vmatpush1.msra.mxu0 0.0
  %1023 = vmatprep.subr.mxu0 0.0
  %1024 = vmatpush1.msra.mxu0 0.0
  %1025 = vmatprep.subr.mxu0 0.0
  %1026 = vmatpush1.msra.mxu0 0.0
  %1027 = vmatprep.subr.mxu0 0.0
  %1028 = vmatpush1.msra.mxu0 0.0
  %1029 = vmatprep.subr.mxu0 0.0
  %1030 = vmatpush1.msra.mxu0 0.0
  %1031 = vmatprep.subr.mxu0 0.0
  %1032 = vmatpush1.msra.mxu0 0.0
  %1033 = vmatprep.subr.mxu0 0.0
  %1034 = vmatpush1.msra.mxu0 0.0
  %1035 = vmatprep.subr.mxu0 0.0
  %1036 = vmatpush1.msra.mxu0 0.0
  %1037 = vmatprep.subr.mxu0 0.0
  %1038 = vmatpush1.msra.mxu0 0.0
  %1039 = vmatprep.subr.mxu0 0.0
  %1040 = vmatpush1.msra.mxu0 0.0
  %1041 = vmatprep.mubr.f32.mxu0 0.0
  %1042 = vmatmul.mubr.f32.gmra.mrb[0].mxu0 %v897
  %v1043 = vpop.f32.mrb[0].mxu0
  %v1044 = vadd.f32 0.0, %v1043
  %v1045 = vpop.f32.mrb[0].mxu0
  %1046 = vdwg.mxu0
  %v1047 = vadd.f32 %v903, %v973
  %v1048 = vadd.f32 %v904, %v975
  %v1049 = vxor.u32 %v1047, 2147483648
  %v1050 = vxor.u32 %v1048, 2147483648
  %v1051 = vmul.f32 %v1049, 1.442695
  %v1052 = vpow.pop %v1051
  %v1053 = vmul.f32 %v1050, 1.442695
  %v1054 = vpow.pop %v1053
  %v1055 = vadd.f32 %v1052, 1.0
  %v1056 = vadd.f32 %v1054, 1.0
  %v1057 = vrcp.pop %v1055
  %v1058 = vmul.f32 1.0, %v1057
  %v1059 = vrcp.pop %v1056
  %v1060 = vmul.f32 1.0, %v1059
  %v1061 = vadd.f32 %v1044, %v388
  %v1062 = vmul.f32 %v1058, %v1061
  %v1063 = vadd.f32 %v905, %v1062
  %v1064 = vtanh.pop %v1063
  %v1065 = vsub.f32 %v897, %v1064
  %v1066 = vmul.f32 %v1060, %v1065
  %v1067 = vadd.f32 %v1064, %v1066
  %s1068 = scalar_lea.vmem [#allocation3], 24
  %1069 = vst [vmem:[%s1068] sm:$0xff] %v1067
  %s1070 = smul.u32 4, 3
  %s1071 = smul.addr %s1070, 8
  %s1072 = scalar_lea.vmem [#allocation2], %s1071
  %v1073 = vld [vmem:[%s1072] sm:$0xff]
  %v1074 = vld [vmem:[%s1072 + $0x8] sm:$0xff]
  %v1075 = vld [vmem:[%s1072 + $0x10] sm:$0xff]
  %1076 = vmatprep.subr.mxu0 %v336
  %1077 = vmatpush1.msra.mxu0 %v335
  %1078 = vmatprep.subr.mxu0 %v339
  %1079 = vmatpush1.msra.mxu0 %v338
  %1080 = vmatprep.subr.mxu0 %v342
  %1081 = vmatpush1.msra.mxu0 %v341
  %1082 = vmatprep.subr.mxu0 %v345
  %1083 = vmatpush1.msra.mxu0 %v344
  %1084 = vmatprep.subr.mxu0 %v348
  %1085 = vmatpush1.msra.mxu0 %v347
  %1086 = vmatprep.subr.mxu0 %v351
  %1087 = vmatpush1.msra.mxu0 %v350
  %1088 = vmatprep.subr.mxu0 %v354
  %1089 = vmatpush1.msra.mxu0 %v353
  %1090 = vmatprep.subr.mxu0 %v357
  %1091 = vmatpush1.msra.mxu0 %v356
  %1092 = vmatprep.subr.mxu0 %v360
  %1093 = vmatpush1.msra.mxu0 %v359
  %1094 = vmatprep.subr.mxu0 %v363
  %1095 = vmatpush1.msra.mxu0 %v362
  %1096 = vmatprep.subr.mxu0 %v366
  %1097 = vmatpush1.msra.mxu0 %v365
  %1098 = vmatprep.subr.mxu0 %v369
  %1099 = vmatpush1.msra.mxu0 %v368
  %1100 = vmatprep.subr.mxu0 %v372
  %1101 = vmatpush1.msra.mxu0 %v371
  %1102 = vmatprep.subr.mxu0 %v375
  %1103 = vmatpush1.msra.mxu0 %v374
  %1104 = vmatprep.subr.mxu0 %v378
  %1105 = vmatpush1.msra.mxu0 %v377
  %1106 = vmatprep.subr.mxu0 %v381
  %1107 = vmatpush1.msra.mxu0 %v380
  %1108 = vmatprep.subr.mxu0 0.0
  %1109 = vmatpush1.msra.mxu0 0.0
  %1110 = vmatprep.subr.mxu0 0.0
  %1111 = vmatpush1.msra.mxu0 0.0
  %1112 = vmatprep.subr.mxu0 0.0
  %1113 = vmatpush1.msra.mxu0 0.0
  %1114 = vmatprep.subr.mxu0 0.0
  %1115 = vmatpush1.msra.mxu0 0.0
  %1116 = vmatprep.subr.mxu0 0.0
  %1117 = vmatpush1.msra.mxu0 0.0
  %1118 = vmatprep.subr.mxu0 0.0
  %1119 = vmatpush1.msra.mxu0 0.0
  %1120 = vmatprep.subr.mxu0 0.0
  %1121 = vmatpush1.msra.mxu0 0.0
  %1122 = vmatprep.subr.mxu0 0.0
  %1123 = vmatpush1.msra.mxu0 0.0
  %1124 = vmatprep.subr.mxu0 0.0
  %1125 = vmatpush1.msra.mxu0 0.0
  %1126 = vmatprep.subr.mxu0 0.0
  %1127 = vmatpush1.msra.mxu0 0.0
  %1128 = vmatprep.subr.mxu0 0.0
  %1129 = vmatpush1.msra.mxu0 0.0
  %1130 = vmatprep.subr.mxu0 0.0
  %1131 = vmatpush1.msra.mxu0 0.0
  %1132 = vmatprep.subr.mxu0 0.0
  %1133 = vmatpush1.msra.mxu0 0.0
  %1134 = vmatprep.subr.mxu0 0.0
  %1135 = vmatpush1.msra.mxu0 0.0
  %1136 = vmatprep.subr.mxu0 0.0
  %1137 = vmatpush1.msra.mxu0 0.0
  %1138 = vmatprep.subr.mxu0 0.0
  %1139 = vmatpush1.msra.mxu0 0.0
  %1140 = vmatprep.mubr.f32.mxu0 0.0
  %1141 = vmatmul.mubr.f32.gmra.mrb[0].mxu0 %v1067
  %v1142 = vpop.f32.mrb[0].mxu0
  %v1143 = vadd.f32 0.0, %v1142
  %v1144 = vpop.f32.mrb[0].mxu0
  %v1145 = vadd.f32 0.0, %v1144
  %1146 = vdwg.mxu0
  %1147 = vmatprep.subr.mxu0 0.0
  %1148 = vmatpush1.msra.mxu0 %v337
  %1149 = vmatprep.subr.mxu0 0.0
  %1150 = vmatpush1.msra.mxu0 %v340
  %1151 = vmatprep.subr.mxu0 0.0
  %1152 = vmatpush1.msra.mxu0 %v343
  %1153 = vmatprep.subr.mxu0 0.0
  %1154 = vmatpush1.msra.mxu0 %v346
  %1155 = vmatprep.subr.mxu0 0.0
  %1156 = vmatpush1.msra.mxu0 %v349
  %1157 = vmatprep.subr.mxu0 0.0
  %1158 = vmatpush1.msra.mxu0 %v352
  %1159 = vmatprep.subr.mxu0 0.0
  %1160 = vmatpush1.msra.mxu0 %v355
  %1161 = vmatprep.subr.mxu0 0.0
  %1162 = vmatpush1.msra.mxu0 %v358
  %1163 = vmatprep.subr.mxu0 0.0
  %1164 = vmatpush1.msra.mxu0 %v361
  %1165 = vmatprep.subr.mxu0 0.0
  %1166 = vmatpush1.msra.mxu0 %v364
  %1167 = vmatprep.subr.mxu0 0.0
  %1168 = vmatpush1.msra.mxu0 %v367
  %1169 = vmatprep.subr.mxu0 0.0
  %1170 = vmatpush1.msra.mxu0 %v370
  %1171 = vmatprep.subr.mxu0 0.0
  %1172 = vmatpush1.msra.mxu0 %v373
  %1173 = vmatprep.subr.mxu0 0.0
  %1174 = vmatpush1.msra.mxu0 %v376
  %1175 = vmatprep.subr.mxu0 0.0
  %1176 = vmatpush1.msra.mxu0 %v379
  %1177 = vmatprep.subr.mxu0 0.0
  %1178 = vmatpush1.msra.mxu0 %v382
  %1179 = vmatprep.subr.mxu0 0.0
  %1180 = vmatpush1.msra.mxu0 0.0
  %1181 = vmatprep.subr.mxu0 0.0
  %1182 = vmatpush1.msra.mxu0 0.0
  %1183 = vmatprep.subr.mxu0 0.0
  %1184 = vmatpush1.msra.mxu0 0.0
  %1185 = vmatprep.subr.mxu0 0.0
  %1186 = vmatpush1.msra.mxu0 0.0
  %1187 = vmatprep.subr.mxu0 0.0
  %1188 = vmatpush1.msra.mxu0 0.0
  %1189 = vmatprep.subr.mxu0 0.0
  %1190 = vmatpush1.msra.mxu0 0.0
  %1191 = vmatprep.subr.mxu0 0.0
  %1192 = vmatpush1.msra.mxu0 0.0
  %1193 = vmatprep.subr.mxu0 0.0
  %1194 = vmatpush1.msra.mxu0 0.0
  %1195 = vmatprep.subr.mxu0 0.0
  %1196 = vmatpush1.msra.mxu0 0.0
  %1197 = vmatprep.subr.mxu0 0.0
  %1198 = vmatpush1.msra.mxu0 0.0
  %1199 = vmatprep.subr.mxu0 0.0
  %1200 = vmatpush1.msra.mxu0 0.0
  %1201 = vmatprep.subr.mxu0 0.0
  %1202 = vmatpush1.msra.mxu0 0.0
  %1203 = vmatprep.subr.mxu0 0.0
  %1204 = vmatpush1.msra.mxu0 0.0
  %1205 = vmatprep.subr.mxu0 0.0
  %1206 = vmatpush1.msra.mxu0 0.0
  %1207 = vmatprep.subr.mxu0 0.0
  %1208 = vmatpush1.msra.mxu0 0.0
  %1209 = vmatprep.subr.mxu0 0.0
  %1210 = vmatpush1.msra.mxu0 0.0
  %1211 = vmatprep.mubr.f32.mxu0 0.0
  %1212 = vmatmul.mubr.f32.gmra.mrb[0].mxu0 %v1067
  %v1213 = vpop.f32.mrb[0].mxu0
  %v1214 = vadd.f32 0.0, %v1213
  %v1215 = vpop.f32.mrb[0].mxu0
  %1216 = vdwg.mxu0
  %v1217 = vadd.f32 %v1073, %v1143
  %v1218 = vadd.f32 %v1074, %v1145
  %v1219 = vxor.u32 %v1217, 2147483648
  %v1220 = vxor.u32 %v1218, 2147483648
  %v1221 = vmul.f32 %v1219, 1.442695
  %v1222 = vpow.pop %v1221
  %v1223 = vmul.f32 %v1220, 1.442695
  %v1224 = vpow.pop %v1223
  %v1225 = vadd.f32 %v1222, 1.0
  %v1226 = vadd.f32 %v1224, 1.0
  %v1227 = vrcp.pop %v1225
  %v1228 = vmul.f32 1.0, %v1227
  %v1229 = vrcp.pop %v1226
  %v1230 = vmul.f32 1.0, %v1229
  %v1231 = vadd.f32 %v1214, %v388
  %v1232 = vmul.f32 %v1228, %v1231
  %v1233 = vadd.f32 %v1075, %v1232
  %v1234 = vtanh.pop %v1233
  %v1235 = vsub.f32 %v1067, %v1234
  %v1236 = vmul.f32 %v1230, %v1235
  %v1237 = vadd.f32 %v1234, %v1236
  %s1238 = scalar_lea.vmem [#allocation3], 32
  %1239 = vst [vmem:[%s1238] sm:$0xff] %v1237
  %s1240 = smul.u32 5, 3
  %s1241 = smul.addr %s1240, 8
  %s1242 = scalar_lea.vmem [#allocation2], %s1241
  %v1243 = vld [vmem:[%s1242] sm:$0xff]
  %v1244 = vld [vmem:[%s1242 + $0x8] sm:$0xff]
  %v1245 = vld [vmem:[%s1242 + $0x10] sm:$0xff]
  %1246 = vmatprep.subr.mxu0 %v336
  %1247 = vmatpush1.msra.mxu0 %v335
  %1248 = vmatprep.subr.mxu0 %v339
  %1249 = vmatpush1.msra.mxu0 %v338
  %1250 = vmatprep.subr.mxu0 %v342
  %1251 = vmatpush1.msra.mxu0 %v341
  %1252 = vmatprep.subr.mxu0 %v345
  %1253 = vmatpush1.msra.mxu0 %v344
  %1254 = vmatprep.subr.mxu0 %v348
  %1255 = vmatpush1.msra.mxu0 %v347
  %1256 = vmatprep.subr.mxu0 %v351
  %1257 = vmatpush1.msra.mxu0 %v350
  %1258 = vmatprep.subr.mxu0 %v354
  %1259 = vmatpush1.msra.mxu0 %v353
  %1260 = vmatprep.subr.mxu0 %v357
  %1261 = vmatpush1.msra.mxu0 %v356
  %1262 = vmatprep.subr.mxu0 %v360
  %1263 = vmatpush1.msra.mxu0 %v359
  %1264 = vmatprep.subr.mxu0 %v363
  %1265 = vmatpush1.msra.mxu0 %v362
  %1266 = vmatprep.subr.mxu0 %v366
  %1267 = vmatpush1.msra.mxu0 %v365
  %1268 = vmatprep.subr.mxu0 %v369
  %1269 = vmatpush1.msra.mxu0 %v368
  %1270 = vmatprep.subr.mxu0 %v372
  %1271 = vmatpush1.msra.mxu0 %v371
  %1272 = vmatprep.subr.mxu0 %v375
  %1273 = vmatpush1.msra.mxu0 %v374
  %1274 = vmatprep.subr.mxu0 %v378
  %1275 = vmatpush1.msra.mxu0 %v377
  %1276 = vmatprep.subr.mxu0 %v381
  %1277 = vmatpush1.msra.mxu0 %v380
  %1278 = vmatprep.subr.mxu0 0.0
  %1279 = vmatpush1.msra.mxu0 0.0
  %1280 = vmatprep.subr.mxu0 0.0
  %1281 = vmatpush1.msra.mxu0 0.0
  %1282 = vmatprep.subr.mxu0 0.0
  %1283 = vmatpush1.msra.mxu0 0.0
  %1284 = vmatprep.subr.mxu0 0.0
  %1285 = vmatpush1.msra.mxu0 0.0
  %1286 = vmatprep.subr.mxu0 0.0
  %1287 = vmatpush1.msra.mxu0 0.0
  %1288 = vmatprep.subr.mxu0 0.0
  %1289 = vmatpush1.msra.mxu0 0.0
  %1290 = vmatprep.subr.mxu0 0.0
  %1291 = vmatpush1.msra.mxu0 0.0
  %1292 = vmatprep.subr.mxu0 0.0
  %1293 = vmatpush1.msra.mxu0 0.0
  %1294 = vmatprep.subr.mxu0 0.0
  %1295 = vmatpush1.msra.mxu0 0.0
  %1296 = vmatprep.subr.mxu0 0.0
  %1297 = vmatpush1.msra.mxu0 0.0
  %1298 = vmatprep.subr.mxu0 0.0
  %1299 = vmatpush1.msra.mxu0 0.0
  %1300 = vmatprep.subr.mxu0 0.0
  %1301 = vmatpush1.msra.mxu0 0.0
  %1302 = vmatprep.subr.mxu0 0.0
  %1303 = vmatpush1.msra.mxu0 0.0
  %1304 = vmatprep.subr.mxu0 0.0
  %1305 = vmatpush1.msra.mxu0 0.0
  %1306 = vmatprep.subr.mxu0 0.0
  %1307 = vmatpush1.msra.mxu0 0.0
  %1308 = vmatprep.subr.mxu0 0.0
  %1309 = vmatpush1.msra.mxu0 0.0
  %1310 = vmatprep.mubr.f32.mxu0 0.0
  %1311 = vmatmul.mubr.f32.gmra.mrb[0].mxu0 %v1237
  %v1312 = vpop.f32.mrb[0].mxu0
  %v1313 = vadd.f32 0.0, %v1312
  %v1314 = vpop.f32.mrb[0].mxu0
  %v1315 = vadd.f32 0.0, %v1314
  %1316 = vdwg.mxu0
  %1317 = vmatprep.subr.mxu0 0.0
  %1318 = vmatpush1.msra.mxu0 %v337
  %1319 = vmatprep.subr.mxu0 0.0
  %1320 = vmatpush1.msra.mxu0 %v340
  %1321 = vmatprep.subr.mxu0 0.0
  %1322 = vmatpush1.msra.mxu0 %v343
  %1323 = vmatprep.subr.mxu0 0.0
  %1324 = vmatpush1.msra.mxu0 %v346
  %1325 = vmatprep.subr.mxu0 0.0
  %1326 = vmatpush1.msra.mxu0 %v349
  %1327 = vmatprep.subr.mxu0 0.0
  %1328 = vmatpush1.msra.mxu0 %v352
  %1329 = vmatprep.subr.mxu0 0.0
  %1330 = vmatpush1.msra.mxu0 %v355
  %1331 = vmatprep.subr.mxu0 0.0
  %1332 = vmatpush1.msra.mxu0 %v358
  %1333 = vmatprep.subr.mxu0 0.0
  %1334 = vmatpush1.msra.mxu0 %v361
  %1335 = vmatprep.subr.mxu0 0.0
  %1336 = vmatpush1.msra.mxu0 %v364
  %1337 = vmatprep.subr.mxu0 0.0
  %1338 = vmatpush1.msra.mxu0 %v367
  %1339 = vmatprep.subr.mxu0 0.0
  %1340 = vmatpush1.msra.mxu0 %v370
  %1341 = vmatprep.subr.mxu0 0.0
  %1342 = vmatpush1.msra.mxu0 %v373
  %1343 = vmatprep.subr.mxu0 0.0
  %1344 = vmatpush1.msra.mxu0 %v376
  %1345 = vmatprep.subr.mxu0 0.0
  %1346 = vmatpush1.msra.mxu0 %v379
  %1347 = vmatprep.subr.mxu0 0.0
  %1348 = vmatpush1.msra.mxu0 %v382
  %1349 = vmatprep.subr.mxu0 0.0
  %1350 = vmatpush1.msra.mxu0 0.0
  %1351 = vmatprep.subr.mxu0 0.0
  %1352 = vmatpush1.msra.mxu0 0.0
  %1353 = vmatprep.subr.mxu0 0.0
  %1354 = vmatpush1.msra.mxu0 0.0
  %1355 = vmatprep.subr.mxu0 0.0
  %1356 = vmatpush1.msra.mxu0 0.0
  %1357 = vmatprep.subr.mxu0 0.0
  %1358 = vmatpush1.msra.mxu0 0.0
  %1359 = vmatprep.subr.mxu0 0.0
  %1360 = vmatpush1.msra.mxu0 0.0
  %1361 = vmatprep.subr.mxu0 0.0
  %1362 = vmatpush1.msra.mxu0 0.0
  %1363 = vmatprep.subr.mxu0 0.0
  %1364 = vmatpush1.msra.mxu0 0.0
  %1365 = vmatprep.subr.mxu0 0.0
  %1366 = vmatpush1.msra.mxu0 0.0
  %1367 = vmatprep.subr.mxu0 0.0
  %1368 = vmatpush1.msra.mxu0 0.0
  %1369 = vmatprep.subr.mxu0 0.0
  %1370 = vmatpush1.msra.mxu0 0.0
  %1371 = vmatprep.subr.mxu0 0.0
  %1372 = vmatpush1.msra.mxu0 0.0
  %1373 = vmatprep.subr.mxu0 0.0
  %1374 = vmatpush1.msra.mxu0 0.0
  %1375 = vmatprep.subr.mxu0 0.0
  %1376 = vmatpush1.msra.mxu0 0.0
  %1377 = vmatprep.subr.mxu0 0.0
  %1378 = vmatpush1.msra.mxu0 0.0
  %1379 = vmatprep.subr.mxu0 0.0
  %1380 = vmatpush1.msra.mxu0 0.0
  %1381 = vmatprep.mubr.f32.mxu0 0.0
  %1382 = vmatmul.mubr.f32.gmra.mrb[0].mxu0 %v1237
  %v1383 = vpop.f32.mrb[0].mxu0
  %v1384 = vadd.f32 0.0, %v1383
  %v1385 = vpop.f32.mrb[0].mxu0
  %1386 = vdwg.mxu0
  %v1387 = vadd.f32 %v1243, %v1313
  %v1388 = vadd.f32 %v1244, %v1315
  %v1389 = vxor.u32 %v1387, 2147483648
  %v1390 = vxor.u32 %v1388, 2147483648
  %v1391 = vmul.f32 %v1389, 1.442695
  %v1392 = vpow.pop %v1391
  %v1393 = vmul.f32 %v1390, 1.442695
  %v1394 = vpow.pop %v1393
  %v1395 = vadd.f32 %v1392, 1.0
  %v1396 = vadd.f32 %v1394, 1.0
  %v1397 = vrcp.pop %v1395
  %v1398 = vmul.f32 1.0, %v1397
  %v1399 = vrcp.pop %v1396
  %v1400 = vmul.f32 1.0, %v1399
  %v1401 = vadd.f32 %v1384, %v388
  %v1402 = vmul.f32 %v1398, %v1401
  %v1403 = vadd.f32 %v1245, %v1402
  %v1404 = vtanh.pop %v1403
  %v1405 = vsub.f32 %v1237, %v1404
  %v1406 = vmul.f32 %v1400, %v1405
  %v1407 = vadd.f32 %v1404, %v1406
  %s1408 = scalar_lea.vmem [#allocation3], 40
  %1409 = vst [vmem:[%s1408] sm:$0xff] %v1407
  %s1410 = smul.u32 6, 3
  %s1411 = smul.addr %s1410, 8
  %s1412 = scalar_lea.vmem [#allocation2], %s1411
  %v1413 = vld [vmem:[%s1412] sm:$0xff]
  %v1414 = vld [vmem:[%s1412 + $0x8] sm:$0xff]
  %v1415 = vld [vmem:[%s1412 + $0x10] sm:$0xff]
  %1416 = vmatprep.subr.mxu0 %v336
  %1417 = vmatpush1.msra.mxu0 %v335
  %1418 = vmatprep.subr.mxu0 %v339
  %1419 = vmatpush1.msra.mxu0 %v338
  %1420 = vmatprep.subr.mxu0 %v342
  %1421 = vmatpush1.msra.mxu0 %v341
  %1422 = vmatprep.subr.mxu0 %v345
  %1423 = vmatpush1.msra.mxu0 %v344
  %1424 = vmatprep.subr.mxu0 %v348
  %1425 = vmatpush1.msra.mxu0 %v347
  %1426 = vmatprep.subr.mxu0 %v351
  %1427 = vmatpush1.msra.mxu0 %v350
  %1428 = vmatprep.subr.mxu0 %v354
  %1429 = vmatpush1.msra.mxu0 %v353
  %1430 = vmatprep.subr.mxu0 %v357
  %1431 = vmatpush1.msra.mxu0 %v356
  %1432 = vmatprep.subr.mxu0 %v360
  %1433 = vmatpush1.msra.mxu0 %v359
  %1434 = vmatprep.subr.mxu0 %v363
  %1435 = vmatpush1.msra.mxu0 %v362
  %1436 = vmatprep.subr.mxu0 %v366
  %1437 = vmatpush1.msra.mxu0 %v365
  %1438 = vmatprep.subr.mxu0 %v369
  %1439 = vmatpush1.msra.mxu0 %v368
  %1440 = vmatprep.subr.mxu0 %v372
  %1441 = vmatpush1.msra.mxu0 %v371
  %1442 = vmatprep.subr.mxu0 %v375
  %1443 = vmatpush1.msra.mxu0 %v374
  %1444 = vmatprep.subr.mxu0 %v378
  %1445 = vmatpush1.msra.mxu0 %v377
  %1446 = vmatprep.subr.mxu0 %v381
  %1447 = vmatpush1.msra.mxu0 %v380
  %1448 = vmatprep.subr.mxu0 0.0
  %1449 = vmatpush1.msra.mxu0 0.0
  %1450 = vmatprep.subr.mxu0 0.0
  %1451 = vmatpush1.msra.mxu0 0.0
  %1452 = vmatprep.subr.mxu0 0.0
  %1453 = vmatpush1.msra.mxu0 0.0
  %1454 = vmatprep.subr.mxu0 0.0
  %1455 = vmatpush1.msra.mxu0 0.0
  %1456 = vmatprep.subr.mxu0 0.0
  %1457 = vmatpush1.msra.mxu0 0.0
  %1458 = vmatprep.subr.mxu0 0.0
  %1459 = vmatpush1.msra.mxu0 0.0
  %1460 = vmatprep.subr.mxu0 0.0
  %1461 = vmatpush1.msra.mxu0 0.0
  %1462 = vmatprep.subr.mxu0 0.0
  %1463 = vmatpush1.msra.mxu0 0.0
  %1464 = vmatprep.subr.mxu0 0.0
  %1465 = vmatpush1.msra.mxu0 0.0
  %1466 = vmatprep.subr.mxu0 0.0
  %1467 = vmatpush1.msra.mxu0 0.0
  %1468 = vmatprep.subr.mxu0 0.0
  %1469 = vmatpush1.msra.mxu0 0.0
  %1470 = vmatprep.subr.mxu0 0.0
  %1471 = vmatpush1.msra.mxu0 0.0
  %1472 = vmatprep.subr.mxu0 0.0
  %1473 = vmatpush1.msra.mxu0 0.0
  %1474 = vmatprep.subr.mxu0 0.0
  %1475 = vmatpush1.msra.mxu0 0.0
  %1476 = vmatprep.subr.mxu0 0.0
  %1477 = vmatpush1.msra.mxu0 0.0
  %1478 = vmatprep.subr.mxu0 0.0
  %1479 = vmatpush1.msra.mxu0 0.0
  %1480 = vmatprep.mubr.f32.mxu0 0.0
  %1481 = vmatmul.mubr.f32.gmra.mrb[0].mxu0 %v1407
  %v1482 = vpop.f32.mrb[0].mxu0
  %v1483 = vadd.f32 0.0, %v1482
  %v1484 = vpop.f32.mrb[0].mxu0
  %v1485 = vadd.f32 0.0, %v1484
  %1486 = vdwg.mxu0
  %1487 = vmatprep.subr.mxu0 0.0
  %1488 = vmatpush1.msra.mxu0 %v337
  %1489 = vmatprep.subr.mxu0 0.0
  %1490 = vmatpush1.msra.mxu0 %v340
  %1491 = vmatprep.subr.mxu0 0.0
  %1492 = vmatpush1.msra.mxu0 %v343
  %1493 = vmatprep.subr.mxu0 0.0
  %1494 = vmatpush1.msra.mxu0 %v346
  %1495 = vmatprep.subr.mxu0 0.0
  %1496 = vmatpush1.msra.mxu0 %v349
  %1497 = vmatprep.subr.mxu0 0.0
  %1498 = vmatpush1.msra.mxu0 %v352
  %1499 = vmatprep.subr.mxu0 0.0
  %1500 = vmatpush1.msra.mxu0 %v355
  %1501 = vmatprep.subr.mxu0 0.0
  %1502 = vmatpush1.msra.mxu0 %v358
  %1503 = vmatprep.subr.mxu0 0.0
  %1504 = vmatpush1.msra.mxu0 %v361
  %1505 = vmatprep.subr.mxu0 0.0
  %1506 = vmatpush1.msra.mxu0 %v364
  %1507 = vmatprep.subr.mxu0 0.0
  %1508 = vmatpush1.msra.mxu0 %v367
  %1509 = vmatprep.subr.mxu0 0.0
  %1510 = vmatpush1.msra.mxu0 %v370
  %1511 = vmatprep.subr.mxu0 0.0
  %1512 = vmatpush1.msra.mxu0 %v373
  %1513 = vmatprep.subr.mxu0 0.0
  %1514 = vmatpush1.msra.mxu0 %v376
  %1515 = vmatprep.subr.mxu0 0.0
  %1516 = vmatpush1.msra.mxu0 %v379
  %1517 = vmatprep.subr.mxu0 0.0
  %1518 = vmatpush1.msra.mxu0 %v382
  %1519 = vmatprep.subr.mxu0 0.0
  %1520 = vmatpush1.msra.mxu0 0.0
  %1521 = vmatprep.subr.mxu0 0.0
  %1522 = vmatpush1.msra.mxu0 0.0
  %1523 = vmatprep.subr.mxu0 0.0
  %1524 = vmatpush1.msra.mxu0 0.0
  %1525 = vmatprep.subr.mxu0 0.0
  %1526 = vmatpush1.msra.mxu0 0.0
  %1527 = vmatprep.subr.mxu0 0.0
  %1528 = vmatpush1.msra.mxu0 0.0
  %1529 = vmatprep.subr.mxu0 0.0
  %1530 = vmatpush1.msra.mxu0 0.0
  %1531 = vmatprep.subr.mxu0 0.0
  %1532 = vmatpush1.msra.mxu0 0.0
  %1533 = vmatprep.subr.mxu0 0.0
  %1534 = vmatpush1.msra.mxu0 0.0
  %1535 = vmatprep.subr.mxu0 0.0
  %1536 = vmatpush1.msra.mxu0 0.0
  %1537 = vmatprep.subr.mxu0 0.0
  %1538 = vmatpush1.msra.mxu0 0.0
  %1539 = vmatprep.subr.mxu0 0.0
  %1540 = vmatpush1.msra.mxu0 0.0
  %1541 = vmatprep.subr.mxu0 0.0
  %1542 = vmatpush1.msra.mxu0 0.0
  %1543 = vmatprep.subr.mxu0 0.0
  %1544 = vmatpush1.msra.mxu0 0.0
  %1545 = vmatprep.subr.mxu0 0.0
  %1546 = vmatpush1.msra.mxu0 0.0
  %1547 = vmatprep.subr.mxu0 0.0
  %1548 = vmatpush1.msra.mxu0 0.0
  %1549 = vmatprep.subr.mxu0 0.0
  %1550 = vmatpush1.msra.mxu0 0.0
  %1551 = vmatprep.mubr.f32.mxu0 0.0
  %1552 = vmatmul.mubr.f32.gmra.mrb[0].mxu0 %v1407
  %v1553 = vpop.f32.mrb[0].mxu0
  %v1554 = vadd.f32 0.0, %v1553
  %v1555 = vpop.f32.mrb[0].mxu0
  %1556 = vdwg.mxu0
  %v1557 = vadd.f32 %v1413, %v1483
  %v1558 = vadd.f32 %v1414, %v1485
  %v1559 = vxor.u32 %v1557, 2147483648
  %v1560 = vxor.u32 %v1558, 2147483648
  %v1561 = vmul.f32 %v1559, 1.442695
  %v1562 = vpow.pop %v1561
  %v1563 = vmul.f32 %v1560, 1.442695
  %v1564 = vpow.pop %v1563
  %v1565 = vadd.f32 %v1562, 1.0
  %v1566 = vadd.f32 %v1564, 1.0
  %v1567 = vrcp.pop %v1565
  %v1568 = vmul.f32 1.0, %v1567
  %v1569 = vrcp.pop %v1566
  %v1570 = vmul.f32 1.0, %v1569
  %v1571 = vadd.f32 %v1554, %v388
  %v1572 = vmul.f32 %v1568, %v1571
  %v1573 = vadd.f32 %v1415, %v1572
  %v1574 = vtanh.pop %v1573
  %v1575 = vsub.f32 %v1407, %v1574
  %v1576 = vmul.f32 %v1570, %v1575
  %v1577 = vadd.f32 %v1574, %v1576
  %s1578 = scalar_lea.vmem [#allocation3], 48
  %1579 = vst [vmem:[%s1578] sm:$0xff] %v1577
  %s1580 = smul.u32 7, 3
  %s1581 = smul.addr %s1580, 8
  %s1582 = scalar_lea.vmem [#allocation2], %s1581
  %v1583 = vld [vmem:[%s1582] sm:$0xff]
  %v1584 = vld [vmem:[%s1582 + $0x8] sm:$0xff]
  %v1585 = vld [vmem:[%s1582 + $0x10] sm:$0xff]
  %1586 = vmatprep.subr.mxu0 %v336
  %1587 = vmatpush1.msra.mxu0 %v335
  %1588 = vmatprep.subr.mxu0 %v339
  %1589 = vmatpush1.msra.mxu0 %v338
  %1590 = vmatprep.subr.mxu0 %v342
  %1591 = vmatpush1.msra.mxu0 %v341
  %1592 = vmatprep.subr.mxu0 %v345
  %1593 = vmatpush1.msra.mxu0 %v344
  %1594 = vmatprep.subr.mxu0 %v348
  %1595 = vmatpush1.msra.mxu0 %v347
  %1596 = vmatprep.subr.mxu0 %v351
  %1597 = vmatpush1.msra.mxu0 %v350
  %1598 = vmatprep.subr.mxu0 %v354
  %1599 = vmatpush1.msra.mxu0 %v353
  %1600 = vmatprep.subr.mxu0 %v357
  %1601 = vmatpush1.msra.mxu0 %v356
  %1602 = vmatprep.subr.mxu0 %v360
  %1603 = vmatpush1.msra.mxu0 %v359
  %1604 = vmatprep.subr.mxu0 %v363
  %1605 = vmatpush1.msra.mxu0 %v362
  %1606 = vmatprep.subr.mxu0 %v366
  %1607 = vmatpush1.msra.mxu0 %v365
  %1608 = vmatprep.subr.mxu0 %v369
  %1609 = vmatpush1.msra.mxu0 %v368
  %1610 = vmatprep.subr.mxu0 %v372
  %1611 = vmatpush1.msra.mxu0 %v371
  %1612 = vmatprep.subr.mxu0 %v375
  %1613 = vmatpush1.msra.mxu0 %v374
  %1614 = vmatprep.subr.mxu0 %v378
  %1615 = vmatpush1.msra.mxu0 %v377
  %1616 = vmatprep.subr.mxu0 %v381
  %1617 = vmatpush1.msra.mxu0 %v380
  %1618 = vmatprep.subr.mxu0 0.0
  %1619 = vmatpush1.msra.mxu0 0.0
  %1620 = vmatprep.subr.mxu0 0.0
  %1621 = vmatpush1.msra.mxu0 0.0
  %1622 = vmatprep.subr.mxu0 0.0
  %1623 = vmatpush1.msra.mxu0 0.0
  %1624 = vmatprep.subr.mxu0 0.0
  %1625 = vmatpush1.msra.mxu0 0.0
  %1626 = vmatprep.subr.mxu0 0.0
  %1627 = vmatpush1.msra.mxu0 0.0
  %1628 = vmatprep.subr.mxu0 0.0
  %1629 = vmatpush1.msra.mxu0 0.0
  %1630 = vmatprep.subr.mxu0 0.0
  %1631 = vmatpush1.msra.mxu0 0.0
  %1632 = vmatprep.subr.mxu0 0.0
  %1633 = vmatpush1.msra.mxu0 0.0
  %1634 = vmatprep.subr.mxu0 0.0
  %1635 = vmatpush1.msra.mxu0 0.0
  %1636 = vmatprep.subr.mxu0 0.0
  %1637 = vmatpush1.msra.mxu0 0.0
  %1638 = vmatprep.subr.mxu0 0.0
  %1639 = vmatpush1.msra.mxu0 0.0
  %1640 = vmatprep.subr.mxu0 0.0
  %1641 = vmatpush1.msra.mxu0 0.0
  %1642 = vmatprep.subr.mxu0 0.0
  %1643 = vmatpush1.msra.mxu0 0.0
  %1644 = vmatprep.subr.mxu0 0.0
  %1645 = vmatpush1.msra.mxu0 0.0
  %1646 = vmatprep.subr.mxu0 0.0
  %1647 = vmatpush1.msra.mxu0 0.0
  %1648 = vmatprep.subr.mxu0 0.0
  %1649 = vmatpush1.msra.mxu0 0.0
  %1650 = vmatprep.mubr.f32.mxu0 0.0
  %1651 = vmatmul.mubr.f32.gmra.mrb[0].mxu0 %v1577
  %v1652 = vpop.f32.mrb[0].mxu0
  %v1653 = vadd.f32 0.0, %v1652
  %v1654 = vpop.f32.mrb[0].mxu0
  %v1655 = vadd.f32 0.0, %v1654
  %1656 = vdwg.mxu0
  %1657 = vmatprep.subr.mxu0 0.0
  %1658 = vmatpush1.msra.mxu0 %v337
  %1659 = vmatprep.subr.mxu0 0.0
  %1660 = vmatpush1.msra.mxu0 %v340
  %1661 = vmatprep.subr.mxu0 0.0
  %1662 = vmatpush1.msra.mxu0 %v343
  %1663 = vmatprep.subr.mxu0 0.0
  %1664 = vmatpush1.msra.mxu0 %v346
  %1665 = vmatprep.subr.mxu0 0.0
  %1666 = vmatpush1.msra.mxu0 %v349
  %1667 = vmatprep.subr.mxu0 0.0
  %1668 = vmatpush1.msra.mxu0 %v352
  %1669 = vmatprep.subr.mxu0 0.0
  %1670 = vmatpush1.msra.mxu0 %v355
  %1671 = vmatprep.subr.mxu0 0.0
  %1672 = vmatpush1.msra.mxu0 %v358
  %1673 = vmatprep.subr.mxu0 0.0
  %1674 = vmatpush1.msra.mxu0 %v361
  %1675 = vmatprep.subr.mxu0 0.0
  %1676 = vmatpush1.msra.mxu0 %v364
  %1677 = vmatprep.subr.mxu0 0.0
  %1678 = vmatpush1.msra.mxu0 %v367
  %1679 = vmatprep.subr.mxu0 0.0
  %1680 = vmatpush1.msra.mxu0 %v370
  %1681 = vmatprep.subr.mxu0 0.0
  %1682 = vmatpush1.msra.mxu0 %v373
  %1683 = vmatprep.subr.mxu0 0.0
  %1684 = vmatpush1.msra.mxu0 %v376
  %1685 = vmatprep.subr.mxu0 0.0
  %1686 = vmatpush1.msra.mxu0 %v379
  %1687 = vmatprep.subr.mxu0 0.0
  %1688 = vmatpush1.msra.mxu0 %v382
  %1689 = vmatprep.subr.mxu0 0.0
  %1690 = vmatpush1.msra.mxu0 0.0
  %1691 = vmatprep.subr.mxu0 0.0
  %1692 = vmatpush1.msra.mxu0 0.0
  %1693 = vmatprep.subr.mxu0 0.0
  %1694 = vmatpush1.msra.mxu0 0.0
  %1695 = vmatprep.subr.mxu0 0.0
  %1696 = vmatpush1.msra.mxu0 0.0
  %1697 = vmatprep.subr.mxu0 0.0
  %1698 = vmatpush1.msra.mxu0 0.0
  %1699 = vmatprep.subr.mxu0 0.0
  %1700 = vmatpush1.msra.mxu0 0.0
  %1701 = vmatprep.subr.mxu0 0.0
  %1702 = vmatpush1.msra.mxu0 0.0
  %1703 = vmatprep.subr.mxu0 0.0
  %1704 = vmatpush1.msra.mxu0 0.0
  %1705 = vmatprep.subr.mxu0 0.0
  %1706 = vmatpush1.msra.mxu0 0.0
  %1707 = vmatprep.subr.mxu0 0.0
  %1708 = vmatpush1.msra.mxu0 0.0
  %1709 = vmatprep.subr.mxu0 0.0
  %1710 = vmatpush1.msra.mxu0 0.0
  %1711 = vmatprep.subr.mxu0 0.0
  %1712 = vmatpush1.msra.mxu0 0.0
  %1713 = vmatprep.subr.mxu0 0.0
  %1714 = vmatpush1.msra.mxu0 0.0
  %1715 = vmatprep.subr.mxu0 0.0
  %1716 = vmatpush1.msra.mxu0 0.0
  %1717 = vmatprep.subr.mxu0 0.0
  %1718 = vmatpush1.msra.mxu0 0.0
  %1719 = vmatprep.subr.mxu0 0.0
  %1720 = vmatpush1.msra.mxu0 0.0
  %1721 = vmatprep.mubr.f32.mxu0 0.0
  %1722 = vmatmul.mubr.f32.gmra.mrb[0].mxu0 %v1577
  %v1723 = vpop.f32.mrb[0].mxu0
  %v1724 = vadd.f32 0.0, %v1723
  %v1725 = vpop.f32.mrb[0].mxu0
  %1726 = vdwg.mxu0
  %v1727 = vadd.f32 %v1583, %v1653
  %v1728 = vadd.f32 %v1584, %v1655
  %v1729 = vxor.u32 %v1727, 2147483648
  %v1730 = vxor.u32 %v1728, 2147483648
  %v1731 = vmul.f32 %v1729, 1.442695
  %v1732 = vpow.pop %v1731
  %v1733 = vmul.f32 %v1730, 1.442695
  %v1734 = vpow.pop %v1733
  %v1735 = vadd.f32 %v1732, 1.0
  %v1736 = vadd.f32 %v1734, 1.0
  %v1737 = vrcp.pop %v1735
  %v1738 = vmul.f32 1.0, %v1737
  %v1739 = vrcp.pop %v1736
  %v1740 = vmul.f32 1.0, %v1739
  %v1741 = vadd.f32 %v1724, %v388
  %v1742 = vmul.f32 %v1738, %v1741
  %v1743 = vadd.f32 %v1585, %v1742
  %v1744 = vtanh.pop %v1743
  %v1745 = vsub.f32 %v1577, %v1744
  %v1746 = vmul.f32 %v1740, %v1745
  %v1747 = vadd.f32 %v1744, %v1746
  %s1748 = scalar_lea.vmem [#allocation3], 56
  %1749 = vst [vmem:[%s1748] sm:$0xff] %v1747
  %1750 = vst [vmem:[%s9] sm:$0xff] %v1747
  %v1751 = vld [vmem:[#allocation3] sm:$0xff]
  %v1752 = vld [vmem:[#allocation3 + $0x8] sm:$0xff]
  %v1753 = vld [vmem:[#allocation3 + $0x10] sm:$0xff]
  %v1754 = vld [vmem:[#allocation3 + $0x18] sm:$0xff]
  %v1755 = vld [vmem:[#allocation3 + $0x20] sm:$0xff]
  %v1756 = vld [vmem:[#allocation3 + $0x28] sm:$0xff]
  %v1757 = vld [vmem:[#allocation3 + $0x30] sm:$0xff]
  %v1758 = vld [vmem:[#allocation3 + $0x38] sm:$0xff]
  %v1759 = vld [vmem:[%s6] sm:$0xff]
  %v1760 = vld [vmem:[%s6 + $0x8] sm:$0xff]
  %v1761 = vld [vmem:[%s6 + $0x10] sm:$0xff]
  %v1762 = vld [vmem:[%s6 + $0x18] sm:$0xff]
  %v1763 = vld [vmem:[%s6 + $0x20] sm:$0xff]
  %v1764 = vld [vmem:[%s6 + $0x28] sm:$0xff]
  %v1765 = vld [vmem:[%s6 + $0x30] sm:$0xff]
  %v1766 = vld [vmem:[%s6 + $0x38] sm:$0xff]
  %v1767 = vld [vmem:[%s6 + $0x40] sm:$0xff]
  %v1768 = vld [vmem:[%s6 + $0x48] sm:$0xff]
  %v1769 = vld [vmem:[%s6 + $0x50] sm:$0xff]
  %v1770 = vld [vmem:[%s6 + $0x58] sm:$0xff]
  %v1771 = vld [vmem:[%s6 + $0x60] sm:$0xff]
  %v1772 = vld [vmem:[%s6 + $0x68] sm:$0xff]
  %v1773 = vld [vmem:[%s6 + $0x70] sm:$0xff]
  %v1774 = vld [vmem:[%s6 + $0x78] sm:$0xff]
  %v1775 = vld [vmem:[%s7] sm:$0x1]
  %v1777 = vlaneseq
  %v1778 = vshrl.u32 %v1777, 7
  %v1779 = vsub.s32 0, %v1778
  %v1780 = vrot.slane %v1775, %v1779
  %1782 = vmatprep.subr.mxu0 0.0
  %1783 = vmatpush1.msra.mxu0 %v1759
  %1784 = vmatprep.subr.mxu0 0.0
  %1785 = vmatpush1.msra.mxu0 %v1760
  %1786 = vmatprep.subr.mxu0 0.0
  %1787 = vmatpush1.msra.mxu0 %v1761
  %1788 = vmatprep.subr.mxu0 0.0
  %1789 = vmatpush1.msra.mxu0 %v1762
  %1790 = vmatprep.subr.mxu0 0.0
  %1791 = vmatpush1.msra.mxu0 %v1763
  %1792 = vmatprep.subr.mxu0 0.0
  %1793 = vmatpush1.msra.mxu0 %v1764
  %1794 = vmatprep.subr.mxu0 0.0
  %1795 = vmatpush1.msra.mxu0 %v1765
  %1796 = vmatprep.subr.mxu0 0.0
  %1797 = vmatpush1.msra.mxu0 %v1766
  %1798 = vmatprep.subr.mxu0 0.0
  %1799 = vmatpush1.msra.mxu0 %v1767
  %1800 = vmatprep.subr.mxu0 0.0
  %1801 = vmatpush1.msra.mxu0 %v1768
  %1802 = vmatprep.subr.mxu0 0.0
  %1803 = vmatpush1.msra.mxu0 %v1769
  %1804 = vmatprep.subr.mxu0 0.0
  %1805 = vmatpush1.msra.mxu0 %v1770
  %1806 = vmatprep.subr.mxu0 0.0
  %1807 = vmatpush1.msra.mxu0 %v1771
  %1808 = vmatprep.subr.mxu0 0.0
  %1809 = vmatpush1.msra.mxu0 %v1772
  %1810 = vmatprep.subr.mxu0 0.0
  %1811 = vmatpush1.msra.mxu0 %v1773
  %1812 = vmatprep.subr.mxu0 0.0
  %1813 = vmatpush1.msra.mxu0 %v1774
  %1814 = vmatprep.subr.mxu0 0.0
  %1815 = vmatpush1.msra.mxu0 0.0
  %1816 = vmatprep.subr.mxu0 0.0
  %1817 = vmatpush1.msra.mxu0 0.0
  %1818 = vmatprep.subr.mxu0 0.0
  %1819 = vmatpush1.msra.mxu0 0.0
  %1820 = vmatprep.subr.mxu0 0.0
  %1821 = vmatpush1.msra.mxu0 0.0
  %1822 = vmatprep.subr.mxu0 0.0
  %1823 = vmatpush1.msra.mxu0 0.0
  %1824 = vmatprep.subr.mxu0 0.0
  %1825 = vmatpush1.msra.mxu0 0.0
  %1826 = vmatprep.subr.mxu0 0.0
  %1827 = vmatpush1.msra.mxu0 0.0
  %1828 = vmatprep.subr.mxu0 0.0
  %1829 = vmatpush1.msra.mxu0 0.0
  %1830 = vmatprep.subr.mxu0 0.0
  %1831 = vmatpush1.msra.mxu0 0.0
  %1832 = vmatprep.subr.mxu0 0.0
  %1833 = vmatpush1.msra.mxu0 0.0
  %1834 = vmatprep.subr.mxu0 0.0
  %1835 = vmatpush1.msra.mxu0 0.0
  %1836 = vmatprep.subr.mxu0 0.0
  %1837 = vmatpush1.msra.mxu0 0.0
  %1838 = vmatprep.subr.mxu0 0.0
  %1839 = vmatpush1.msra.mxu0 0.0
  %1840 = vmatprep.subr.mxu0 0.0
  %1841 = vmatpush1.msra.mxu0 0.0
  %1842 = vmatprep.subr.mxu0 0.0
  %1843 = vmatpush1.msra.mxu0 0.0
  %1844 = vmatprep.subr.mxu0 0.0
  %1845 = vmatpush1.msra.mxu0 0.0
  %1846 = vmatprep.mubr.f32.mxu0 0.0
  %1847 = vmatmul.mubr.f32.gmra.mrb[0].mxu0 %v1751
  %v1848 = vpop.f32.mrb[0].mxu0
  %v1849 = vadd.f32 %v1780, %v1848
  %v1850 = vpop.f32.mrb[0].mxu0
  %1851 = vmatprep.mubr.f32.mxu0 0.0
  %1852 = vmatmul.mubr.f32.gmra.mrb[0].mxu0 %v1752
  %v1853 = vpop.f32.mrb[0].mxu0
  %v1854 = vadd.f32 %v1780, %v1853
  %v1855 = vpop.f32.mrb[0].mxu0
  %1856 = vmatprep.mubr.f32.mxu0 0.0
  %1857 = vmatmul.mubr.f32.gmra.mrb[0].mxu0 %v1753
  %v1858 = vpop.f32.mrb[0].mxu0
  %v1859 = vadd.f32 %v1780, %v1858
  %v1860 = vpop.f32.mrb[0].mxu0
  %1861 = vmatprep.mubr.f32.mxu0 0.0
  %1862 = vmatmul.mubr.f32.gmra.mrb[0].mxu0 %v1754
  %v1863 = vpop.f32.mrb[0].mxu0
  %v1864 = vadd.f32 %v1780, %v1863
  %v1865 = vpop.f32.mrb[0].mxu0
  %1866 = vmatprep.mubr.f32.mxu0 0.0
  %1867 = vmatmul.mubr.f32.gmra.mrb[0].mxu0 %v1755
  %v1868 = vpop.f32.mrb[0].mxu0
  %v1869 = vadd.f32 %v1780, %v1868
  %v1870 = vpop.f32.mrb[0].mxu0
  %1871 = vmatprep.mubr.f32.mxu0 0.0
  %1872 = vmatmul.mubr.f32.gmra.mrb[0].mxu0 %v1756
  %v1873 = vpop.f32.mrb[0].mxu0
  %v1874 = vadd.f32 %v1780, %v1873
  %v1875 = vpop.f32.mrb[0].mxu0
  %1876 = vmatprep.mubr.f32.mxu0 0.0
  %1877 = vmatmul.mubr.f32.gmra.mrb[0].mxu0 %v1757
  %v1878 = vpop.f32.mrb[0].mxu0
  %v1879 = vadd.f32 %v1780, %v1878
  %v1880 = vpop.f32.mrb[0].mxu0
  %1881 = vmatprep.mubr.f32.mxu0 0.0
  %1882 = vmatmul.mubr.f32.gmra.mrb[0].mxu0 %v1758
  %v1883 = vpop.f32.mrb[0].mxu0
  %v1884 = vadd.f32 %v1780, %v1883
  %v1885 = vpop.f32.mrb[0].mxu0
  %1886 = vdwg.mxu0
  %v1887 = vmul.f32 %v1849, 1.442695
  %v1888 = vpow.pop %v1887
  %v1889 = vmul.f32 %v1854, 1.442695
  %v1890 = vpow.pop %v1889
  %v1891 = vmul.f32 %v1859, 1.442695
  %v1892 = vpow.pop %v1891
  %v1893 = vmul.f32 %v1864, 1.442695
  %v1894 = vpow.pop %v1893
  %v1895 = vmul.f32 %v1869, 1.442695
  %v1896 = vpow.pop %v1895
  %v1897 = vmul.f32 %v1874, 1.442695
  %v1898 = vpow.pop %v1897
  %v1899 = vmul.f32 %v1879, 1.442695
  %v1900 = vpow.pop %v1899
  %v1901 = vmul.f32 %v1884, 1.442695
  %v1902 = vpow.pop %v1901
  %1903 = vst [vmem:[%s8] sm:$0xff] %v1888
  %1904 = vst [vmem:[%s8 + $0x8] sm:$0xff] %v1890
  %1905 = vst [vmem:[%s8 + $0x10] sm:$0xff] %v1892
  %1906 = vst [vmem:[%s8 + $0x18] sm:$0xff] %v1894
  %1907 = vst [vmem:[%s8 + $0x20] sm:$0xff] %v1896
  %1908 = vst [vmem:[%s8 + $0x28] sm:$0xff] %v1898
  %1909 = vst [vmem:[%s8 + $0x30] sm:$0xff] %v1900
  %1910 = vst [vmem:[%s8 + $0x38] sm:$0xff] %v1902
  // Predicated region
  $region34: #{decoder_forward.1} parent=0 // pred_check
    _
  $region35: #{decoder_forward.1} parent=0 // pred_check_branch
    %1912 = sbr.rel (0) target = $region37
  $region36: #{decoder_forward.1} parent=0 // pred_region
    _
  $region37: #{decoder_forward.1} parent=0 // pred_fallthru
    _
  // Predicated region
  $region38: #{decoder_forward.1} parent=0 // pred_check
    _
  $region39: #{decoder_forward.1} parent=0 // pred_check_branch
    %1914 = sbr.rel (0) target = $region41
  $region40: #{decoder_forward.1} parent=0 // pred_region
    _
  $region41: #{decoder_forward.1} parent=0 // pred_fallthru
    _
  // Predicated region
  $region42: #{decoder_forward.1} parent=0 // pred_check
    _
  $region43: #{decoder_forward.1} parent=0 // pred_check_branch
    %1916 = sbr.rel (0) target = $region45
  $region44: #{decoder_forward.1} parent=0 // pred_region
    _
  $region45: #{decoder_forward.1} parent=0 // pred_fallthru
    _
  // Predicated region
  $region46: #{decoder_forward.1} parent=0 // pred_check
    _
  $region47: #{decoder_forward.1} parent=0 // pred_check_branch
    %1918 = sbr.rel (0) target = $region49
  $region48: #{decoder_forward.1} parent=0 // pred_region
    _
  $region49: #{decoder_forward.1} parent=0 // pred_fallthru
    _

</llo_original>
